<compile_context>
chip_gen: v7x
topology: tpu7x:2x2x1
jax: 0.10.0
libtpu: 0.0.40
codegen_flags: <defaults>
</compile_context>

<pallas_src>
import functools

import jax
import jax.numpy as jnp
import numpy as np
from jax import lax
from jax.experimental import pallas as pl
from jax.experimental.pallas import tpu as pltpu


# ----------------------------- Fused kernel ---------------------------------
# Refs (per lane chunk):
#   x_ref    : (C_pad, LANE)        channel-padded input slab (rows >= C0 are 0)
#   vec_ref  : (L*(2*C_pad+C1), 1)  packed [s1_pad; b1_pad; b2] per layer
#   w1_ref   : (L*C1, C_pad)        conv1 weights, BN2 scale folded, zero-padded cols
#   w2_ref   : (L*G, 9*C1)          conv2 weights flattened to (dy, dx, C1) order
#   mask_ref : (16, LANE)           rows 0..8 = 0/1 validity masks for the 9 taps
#   out_ref  : (C_pad, LANE)        resident feature block (grows in place)
#   patch_ref: (9*C1, LANE)         im2col scratch
def _dense_block_kernel(x_ref, vec_ref, w1_ref, w2_ref, mask_ref, out_ref,
                        patch_ref, *, num_layers, C0, C1, G, C_pad, W):
    LANE = out_ref.shape[1]

    # One full, (8,128)-aligned store: input channels + zeros for every row that
    # is not yet written (keeps later full-block reads exact and NaN-free).
    out_ref[...] = x_ref[...]

    # Hoisted once, reused by all layers (JAX does not CSE these loads).
    masks = [mask_ref[t:t + 1, :] for t in range(9)]            # each (1, LANE)

    vrows = 2 * C_pad + C1
    cin = C0
    for l in range(num_layers):
        base = l * vrows
        s1 = vec_ref[base:base + C_pad, :]                      # (C_pad, 1)
        b1 = vec_ref[base + C_pad:base + 2 * C_pad, :]          # (C_pad, 1)
        b2 = vec_ref[base + 2 * C_pad:base + 2 * C_pad + C1, :]  # (C1, 1)
        w1 = w1_ref[l * C1:(l + 1) * C1, :]                     # (C1, C_pad)
        w2 = w2_ref[l * G:(l + 1) * G, :]                       # (G, 9*C1)

        feat = out_ref[...]                                     # rows >= cin are 0
        a = jnp.maximum(feat * s1 + b1, 0.0)                    # BN1 + ReLU
        # 1x1 conv with BN2 scale folded in; K = C_pad uniform (zero cols pad).
        y = jnp.dot(w1, a, preferred_element_type=jnp.float32)  # (C1, LANE)
        z = jnp.maximum(y + b2, 0.0)                            # BN2 shift + ReLU

        # im2col: 9 masked lane-rotations of z, stored at 8-aligned row offsets.
        for dy in range(3):
            for dx in range(3):
                tap = 3 * dy + dx
                off = (dy - 1) * W + (dx - 1)
                if off == 0:
                    shifted = z
                else:
                    # rolled[p] = z[(p + off) mod LANE]; wrap/cross-image taps are
                    # exactly the masked-out ones, so zero padding is preserved.
                    shifted = pltpu.roll(z, shift=(-off) % LANE, axis=1)
                patch_ref[tap * C1:(tap + 1) * C1, :] = shifted * masks[tap]

        # 3x3 conv as ONE matmul with K = 9*C1 (accumulation stays on the MXU).
        conv_out = jnp.dot(w2, patch_ref[...],
                           preferred_element_type=jnp.float32)  # (G, LANE)
        out_ref[cin:cin + G, :] = conv_out                      # dense concat
        cin += G


# ----------------------------- Wrapper ---------------------------------------
def dense_block_forward(x_nchw, layer_params):
    """DenseBlock forward. x_nchw: (N, C0, H, W) -> (N, C0 + L*G, H, W)."""
    N, C0, H, W = x_nchw.shape
    HW = H * W
    L = len(layer_params)
    G = layer_params[0]["w2"].shape[0]
    C1 = layer_params[0]["w2"].shape[1]
    C_total = C0 + L * G
    C_pad = ((C_total + 7) // 8) * 8

    # Lane chunking: >=2 parallel grid steps when possible (v7x has 2 TCs); each
    # chunk must hold whole images and stay lane-tile (128) aligned.
    if N % 2 == 0 and ((N // 2) * HW) % 128 == 0:
        num_chunks = 2
    else:
        num_chunks = 1
    lane_total = N * HW
    lane_chunk = lane_total // num_chunks

    # Input: pad channels to C_pad with zeros, pack batch into the lane axis.
    x_pad = jnp.pad(x_nchw.astype(jnp.float32),
                    ((0, 0), (0, C_pad - C0), (0, 0), (0, 0)))
    x_packed = jnp.transpose(x_pad, (1, 0, 2, 3)).reshape(C_pad, lane_total)

    # Parameters: fold BN2 scale into conv1, pad to uniform shapes, pack refs.
    vec_rows, w1_rows, w2_rows = [], [], []
    for l, p in enumerate(layer_params):
        cin = C0 + l * G
        s1 = jnp.pad(p["s1"].astype(jnp.float32), (0, C_pad - cin))
        b1 = jnp.pad(p["b1"].astype(jnp.float32), (0, C_pad - cin))
        b2 = p["b2"].astype(jnp.float32)
        vec_rows += [s1, b1, b2]
        # conv1 (C1, cin) with BN2 scale folded; zero-pad columns to C_pad.
        w1s = p["s2"].astype(jnp.float32)[:, None] * p["w1"].astype(jnp.float32)
        w1_rows.append(jnp.pad(w1s, ((0, 0), (0, C_pad - cin))))
        # conv2 (G, C1, 3, 3) -> (G, dy, dx, C1) -> (G, 9*C1), matching tap order.
        w2_rows.append(jnp.transpose(p["w2"].astype(jnp.float32),
                                     (0, 2, 3, 1)).reshape(G, 9 * C1))
    vec = jnp.concatenate(vec_rows)[:, None]          # (L*(2*C_pad+C1), 1)
    w1_all = jnp.concatenate(w1_rows, axis=0)         # (L*C1, C_pad)
    w2_all = jnp.concatenate(w2_rows, axis=0)         # (L*G, 9*C1)

    # 3x3 zero-padding validity masks, built once host-side (0/1 f32), rows
    # padded 9 -> 16 for sublane alignment, tiled across images on the lane axis.
    pix = np.arange(HW)
    prow, pcol = pix // W, pix % W
    m = np.zeros((16, HW), np.float32)
    for dy in range(3):
        for dx in range(3):
            oy, ox = dy - 1, dx - 1
            m[3 * dy + dx] = ((prow + oy >= 0) & (prow + oy < H) &
                              (pcol + ox >= 0) & (pcol + ox < W)).astype(np.float32)
    mask = jnp.asarray(np.tile(m, (1, N)))            # (16, N*HW)

    kernel = functools.partial(_dense_block_kernel, num_layers=L, C0=C0, C1=C1,
                               G=G, C_pad=C_pad, W=W)

    out_packed = pl.pallas_call(
        kernel,
        grid=(num_chunks,),
        in_specs=[
            pl.BlockSpec((C_pad, lane_chunk), lambda n: (0, n)),
            pl.BlockSpec(vec.shape, lambda n: (0, 0)),
            pl.BlockSpec(w1_all.shape, lambda n: (0, 0)),
            pl.BlockSpec(w2_all.shape, lambda n: (0, 0)),
            pl.BlockSpec((16, lane_chunk), lambda n: (0, n)),
        ],
        out_specs=pl.BlockSpec((C_pad, lane_chunk), lambda n: (0, n)),
        out_shape=jax.ShapeDtypeStruct((C_pad, lane_total), jnp.float32),
        scratch_shapes=[pltpu.VMEM((9 * C1, lane_chunk), jnp.float32)],
        compiler_params=pltpu.CompilerParams(dimension_semantics=("parallel",)),
    )(x_packed, vec, w1_all, w2_all, mask)

    out = out_packed[:C_total].reshape(C_total, N, H, W)
    return jnp.transpose(out, (1, 0, 2, 3))


# ----------------------------- Param init ------------------------------------
def make_dense_block_params(key, num_layers, in_channels, growth_rate, bn_size):
    """Deterministic synthetic parameters matching the PyTorch module's shapes."""
    eps = 1e-5
    layers = []
    for i in range(num_layers):
        cin = in_channels + i * growth_rate
        c1 = bn_size * growth_rate
        g = growth_rate
        keys = jax.random.split(jax.random.fold_in(key, i), 6)

        # Eval-mode BatchNorm (running_mean=0, running_var=1) folded to scale/shift.
        gamma1 = 1.0 + 0.1 * jax.random.normal(keys[0], (cin,), jnp.float32)
        beta1 = 0.1 * jax.random.normal(keys[1], (cin,), jnp.float32)
        gamma2 = 1.0 + 0.1 * jax.random.normal(keys[2], (c1,), jnp.float32)
        beta2 = 0.1 * jax.random.normal(keys[3], (c1,), jnp.float32)
        s1 = gamma1 / jnp.sqrt(1.0 + eps)
        b1 = beta1
        s2 = gamma2 / jnp.sqrt(1.0 + eps)
        b2 = beta2

        # conv1: PyTorch weight (c1, cin, 1, 1) -> (c1, cin)
        w1 = 0.1 * jax.random.normal(keys[4], (c1, cin), jnp.float32)
        # conv2: PyTorch weight layout (g, c1, 3, 3)
        w2 = 0.1 * jax.random.normal(keys[5], (g, c1, 3, 3), jnp.float32)

        layers.append(dict(s1=s1, b1=b1, w1=w1, s2=s2, b2=b2, w2=w2))
    return layers


# ----------------------------- Pure-JAX reference ----------------------------
def _reference_dense_block(x_nchw, layer_params):
    x = x_nchw.astype(jnp.float32)
    for p in layer_params:
        a = jnp.maximum(x * p["s1"][None, :, None, None] + p["b1"][None, :, None, None], 0.0)
        y = jnp.einsum("nchw,dc->ndhw", a, p["w1"])
        y = jnp.maximum(y * p["s2"][None, :, None, None] + p["b2"][None, :, None, None], 0.0)
        out = lax.conv_general_dilated(
            y, p["w2"], window_strides=(1, 1), padding=((1, 1), (1, 1)),
            dimension_numbers=("NCHW", "OIHW", "NCHW"))
        x = jnp.concatenate([x, out], axis=1)
    return x


if __name__ == "__main__":
    # DenseBlock(num_layers=3, in_channels=4, growth_rate=4, bn_size=2, drop_rate=0)
    num_layers, in_channels, growth_rate, bn_size = 3, 4, 4, 2
    N, H, W = 2, 16, 16

    key = jax.random.PRNGKey(0)
    x = jax.random.normal(jax.random.fold_in(key, 123), (N, in_channels, H, W),
                          jnp.float32)
    params = make_dense_block_params(key, num_layers, in_channels, growth_rate, bn_size)

    fwd = jax.jit(dense_block_forward)
    out = jax.block_until_ready(fwd(x, params))

    expected_channels = in_channels + num_layers * growth_rate
    assert out.shape == (N, expected_channels, H, W), out.shape

    ref = jax.block_until_ready(_reference_dense_block(x, params))
    np.testing.assert_allclose(np.asarray(out), np.asarray(ref), atol=1e-3, rtol=1e-3)

    print("KERNEL_OK")
</pallas_src>

<mosaic_0001>
module attributes {stable_mosaic.version = 11 : i64} {
  func.func @_dense_block_kernel(%arg0: i32, %arg1: memref<16x256xf32, #tpu.memory_space<vmem>>, %arg2: memref<120x1xf32, #tpu.memory_space<vmem>>, %arg3: memref<24x16xf32, #tpu.memory_space<vmem>>, %arg4: memref<12x72xf32, #tpu.memory_space<vmem>>, %arg5: memref<16x256xf32, #tpu.memory_space<vmem>>, %arg6: memref<16x256xf32, #tpu.memory_space<vmem>>, %arg7: memref<72x256xf32, #tpu.memory_space<vmem>>) attributes {dimension_semantics = [#tpu.dimension_semantics<parallel>], iteration_bounds = array<i64: 2>, scalar_prefetch = 0 : i64, scratch_operands = 1 : i64, tpu.core_type = #tpu.core_type<tc>, window_params = [{transform_indices = @transform_0, window_bounds = array<i64: 16, 256>}, {pipeline_mode = #tpu.pipeline_mode<synchronous>, transform_indices = @transform_1, window_bounds = array<i64: 120, 1>}, {pipeline_mode = #tpu.pipeline_mode<synchronous>, transform_indices = @transform_2, window_bounds = array<i64: 24, 16>}, {pipeline_mode = #tpu.pipeline_mode<synchronous>, transform_indices = @transform_3, window_bounds = array<i64: 12, 72>}, {transform_indices = @transform_4, window_bounds = array<i64: 16, 256>}, {transform_indices = @transform_5, window_bounds = array<i64: 16, 256>}]} {
    %c0 = arith.constant 0 : index
    %c0_0 = arith.constant 0 : index
    %0 = vector.load %arg1[%c0, %c0_0] : memref<16x256xf32, #tpu.memory_space<vmem>>, vector<16x256xf32>
    %c0_1 = arith.constant 0 : index
    %c0_2 = arith.constant 0 : index
    %1 = vector.load %arg6[%c0_1, %c0_2] : memref<16x256xf32, #tpu.memory_space<vmem>>, vector<16x256xf32>
    tpu.vector_store %arg6[%c0_1, %c0_2], %0 {strides = array<i32>} : memref<16x256xf32, #tpu.memory_space<vmem>>, vector<16x256xf32>,
    %c0_3 = arith.constant 0 : index
    %c0_4 = arith.constant 0 : index
    %2 = vector.load %arg5[%c0_3, %c0_4] : memref<16x256xf32, #tpu.memory_space<vmem>>, vector<1x256xf32>
    %c1 = arith.constant 1 : index
    %c0_5 = arith.constant 0 : index
    %3 = vector.load %arg5[%c1, %c0_5] : memref<16x256xf32, #tpu.memory_space<vmem>>, vector<1x256xf32>
    %c2 = arith.constant 2 : index
    %c0_6 = arith.constant 0 : index
    %4 = vector.load %arg5[%c2, %c0_6] : memref<16x256xf32, #tpu.memory_space<vmem>>, vector<1x256xf32>
    %c3 = arith.constant 3 : index
    %c0_7 = arith.constant 0 : index
    %5 = vector.load %arg5[%c3, %c0_7] : memref<16x256xf32, #tpu.memory_space<vmem>>, vector<1x256xf32>
    %c4 = arith.constant 4 : index
    %c0_8 = arith.constant 0 : index
    %6 = vector.load %arg5[%c4, %c0_8] : memref<16x256xf32, #tpu.memory_space<vmem>>, vector<1x256xf32>
    %c5 = arith.constant 5 : index
    %c0_9 = arith.constant 0 : index
    %7 = vector.load %arg5[%c5, %c0_9] : memref<16x256xf32, #tpu.memory_space<vmem>>, vector<1x256xf32>
    %c6 = arith.constant 6 : index
    %c0_10 = arith.constant 0 : index
    %8 = vector.load %arg5[%c6, %c0_10] : memref<16x256xf32, #tpu.memory_space<vmem>>, vector<1x256xf32>
    %c7 = arith.constant 7 : index
    %c0_11 = arith.constant 0 : index
    %9 = vector.load %arg5[%c7, %c0_11] : memref<16x256xf32, #tpu.memory_space<vmem>>, vector<1x256xf32>
    %c8 = arith.constant 8 : index
    %c0_12 = arith.constant 0 : index
    %10 = vector.load %arg5[%c8, %c0_12] : memref<16x256xf32, #tpu.memory_space<vmem>>, vector<1x256xf32>
    %c0_13 = arith.constant 0 : index
    %c0_14 = arith.constant 0 : index
    %11 = vector.load %arg2[%c0_13, %c0_14] : memref<120x1xf32, #tpu.memory_space<vmem>>, vector<16x1xf32>
    %c16 = arith.constant 16 : index
    %c0_15 = arith.constant 0 : index
    %12 = vector.load %arg2[%c16, %c0_15] : memref<120x1xf32, #tpu.memory_space<vmem>>, vector<16x1xf32>
    %c32 = arith.constant 32 : index
    %c0_16 = arith.constant 0 : index
    %13 = vector.load %arg2[%c32, %c0_16] : memref<120x1xf32, #tpu.memory_space<vmem>>, vector<8x1xf32>
    %c0_17 = arith.constant 0 : index
    %c0_18 = arith.constant 0 : index
    %14 = vector.load %arg3[%c0_17, %c0_18] : memref<24x16xf32, #tpu.memory_space<vmem>>, vector<8x16xf32>
    %c0_19 = arith.constant 0 : index
    %c0_20 = arith.constant 0 : index
    %15 = vector.load %arg4[%c0_19, %c0_20] : memref<12x72xf32, #tpu.memory_space<vmem>>, vector<4x72xf32>
    %c0_21 = arith.constant 0 : index
    %c0_22 = arith.constant 0 : index
    %16 = vector.load %arg6[%c0_21, %c0_22] : memref<16x256xf32, #tpu.memory_space<vmem>>, vector<16x256xf32>
    %17 = vector.broadcast %11 : vector<16x1xf32> to vector<16x256xf32>
    %18 = arith.mulf %16, %17 : vector<16x256xf32>
    %19 = vector.broadcast %12 : vector<16x1xf32> to vector<16x256xf32>
    %20 = arith.addf %18, %19 : vector<16x256xf32>
    %cst = arith.constant 0.000000e+00 : f32
    %21 = vector.broadcast %cst : f32 to vector<16x256xf32>
    %22 = arith.maximumf %20, %21 : vector<16x256xf32>
    %cst_23 = arith.constant dense<0.000000e+00> : vector<8x256xf32>
    %23 = tpu.matmul %14, %22, %cst_23 {dimension_numbers = #tpu.dot_dimension_numbers<[1], [0], [0], [1], [0, 0, 1, 1], [], []>} : vector<8x16xf32>, vector<16x256xf32>, vector<8x256xf32> -> vector<8x256xf32>
    %24 = vector.broadcast %13 : vector<8x1xf32> to vector<8x256xf32>
    %25 = arith.addf %23, %24 : vector<8x256xf32>
    %cst_24 = arith.constant 0.000000e+00 : f32
    %26 = vector.broadcast %cst_24 : f32 to vector<8x256xf32>
    %27 = arith.maximumf %25, %26 : vector<8x256xf32>
    %c17_i32 = arith.constant 17 : i32
    %28 = tpu.dynamic_rotate %27 by %c17_i32 dim 1 : vector<8x256xf32>, i32 -> vector<8x256xf32>
    %29 = vector.broadcast %2 : vector<1x256xf32> to vector<8x256xf32>
    %30 = arith.mulf %28, %29 : vector<8x256xf32>
    %c0_25 = arith.constant 0 : index
    %c0_26 = arith.constant 0 : index
    %31 = vector.load %arg7[%c0_25, %c0_26] : memref<72x256xf32, #tpu.memory_space<vmem>>, vector<8x256xf32>
    tpu.vector_store %arg7[%c0_25, %c0_26], %30 {strides = array<i32>} : memref<72x256xf32, #tpu.memory_space<vmem>>, vector<8x256xf32>,
    %c16_i32 = arith.constant 16 : i32
    %32 = tpu.dynamic_rotate %27 by %c16_i32 dim 1 : vector<8x256xf32>, i32 -> vector<8x256xf32>
    %33 = vector.broadcast %3 : vector<1x256xf32> to vector<8x256xf32>
    %34 = arith.mulf %32, %33 : vector<8x256xf32>
    %c8_27 = arith.constant 8 : index
    %c0_28 = arith.constant 0 : index
    %35 = vector.load %arg7[%c8_27, %c0_28] : memref<72x256xf32, #tpu.memory_space<vmem>>, vector<8x256xf32>
    tpu.vector_store %arg7[%c8_27, %c0_28], %34 {strides = array<i32>} : memref<72x256xf32, #tpu.memory_space<vmem>>, vector<8x256xf32>,
    %c15_i32 = arith.constant 15 : i32
    %36 = tpu.dynamic_rotate %27 by %c15_i32 dim 1 : vector<8x256xf32>, i32 -> vector<8x256xf32>
    %37 = vector.broadcast %4 : vector<1x256xf32> to vector<8x256xf32>
    %38 = arith.mulf %36, %37 : vector<8x256xf32>
    %c16_29 = arith.constant 16 : index
    %c0_30 = arith.constant 0 : index
    %39 = vector.load %arg7[%c16_29, %c0_30] : memref<72x256xf32, #tpu.memory_space<vmem>>, vector<8x256xf32>
    tpu.vector_store %arg7[%c16_29, %c0_30], %38 {strides = array<i32>} : memref<72x256xf32, #tpu.memory_space<vmem>>, vector<8x256xf32>,
    %c1_i32 = arith.constant 1 : i32
    %40 = tpu.dynamic_rotate %27 by %c1_i32 dim 1 : vector<8x256xf32>, i32 -> vector<8x256xf32>
    %41 = vector.broadcast %5 : vector<1x256xf32> to vector<8x256xf32>
    %42 = arith.mulf %40, %41 : vector<8x256xf32>
    %c24 = arith.constant 24 : index
    %c0_31 = arith.constant 0 : index
    %43 = vector.load %arg7[%c24, %c0_31] : memref<72x256xf32, #tpu.memory_space<vmem>>, vector<8x256xf32>
    tpu.vector_store %arg7[%c24, %c0_31], %42 {strides = array<i32>} : memref<72x256xf32, #tpu.memory_space<vmem>>, vector<8x256xf32>,
    %44 = vector.broadcast %6 : vector<1x256xf32> to vector<8x256xf32>
    %45 = arith.mulf %27, %44 : vector<8x256xf32>
    %c32_32 = arith.constant 32 : index
    %c0_33 = arith.constant 0 : index
    %46 = vector.load %arg7[%c32_32, %c0_33] : memref<72x256xf32, #tpu.memory_space<vmem>>, vector<8x256xf32>
    tpu.vector_store %arg7[%c32_32, %c0_33], %45 {strides = array<i32>} : memref<72x256xf32, #tpu.memory_space<vmem>>, vector<8x256xf32>,
    %c255_i32 = arith.constant 255 : i32
    %47 = tpu.dynamic_rotate %27 by %c255_i32 dim 1 : vector<8x256xf32>, i32 -> vector<8x256xf32>
    %48 = vector.broadcast %7 : vector<1x256xf32> to vector<8x256xf32>
    %49 = arith.mulf %47, %48 : vector<8x256xf32>
    %c40 = arith.constant 40 : index
    %c0_34 = arith.constant 0 : index
    %50 = vector.load %arg7[%c40, %c0_34] : memref<72x256xf32, #tpu.memory_space<vmem>>, vector<8x256xf32>
    tpu.vector_store %arg7[%c40, %c0_34], %49 {strides = array<i32>} : memref<72x256xf32, #tpu.memory_space<vmem>>, vector<8x256xf32>,
    %c241_i32 = arith.constant 241 : i32
    %51 = tpu.dynamic_rotate %27 by %c241_i32 dim 1 : vector<8x256xf32>, i32 -> vector<8x256xf32>
    %52 = vector.broadcast %8 : vector<1x256xf32> to vector<8x256xf32>
    %53 = arith.mulf %51, %52 : vector<8x256xf32>
    %c48 = arith.constant 48 : index
    %c0_35 = arith.constant 0 : index
    %54 = vector.load %arg7[%c48, %c0_35] : memref<72x256xf32, #tpu.memory_space<vmem>>, vector<8x256xf32>
    tpu.vector_store %arg7[%c48, %c0_35], %53 {strides = array<i32>} : memref<72x256xf32, #tpu.memory_space<vmem>>, vector<8x256xf32>,
    %c240_i32 = arith.constant 240 : i32
    %55 = tpu.dynamic_rotate %27 by %c240_i32 dim 1 : vector<8x256xf32>, i32 -> vector<8x256xf32>
    %56 = vector.broadcast %9 : vector<1x256xf32> to vector<8x256xf32>
    %57 = arith.mulf %55, %56 : vector<8x256xf32>
    %c56 = arith.constant 56 : index
    %c0_36 = arith.constant 0 : index
    %58 = vector.load %arg7[%c56, %c0_36] : memref<72x256xf32, #tpu.memory_space<vmem>>, vector<8x256xf32>
    tpu.vector_store %arg7[%c56, %c0_36], %57 {strides = array<i32>} : memref<72x256xf32, #tpu.memory_space<vmem>>, vector<8x256xf32>,
    %c239_i32 = arith.constant 239 : i32
    %59 = tpu.dynamic_rotate %27 by %c239_i32 dim 1 : vector<8x256xf32>, i32 -> vector<8x256xf32>
    %60 = vector.broadcast %10 : vector<1x256xf32> to vector<8x256xf32>
    %61 = arith.mulf %59, %60 : vector<8x256xf32>
    %c64 = arith.constant 64 : index
    %c0_37 = arith.constant 0 : index
    %62 = vector.load %arg7[%c64, %c0_37] : memref<72x256xf32, #tpu.memory_space<vmem>>, vector<8x256xf32>
    tpu.vector_store %arg7[%c64, %c0_37], %61 {strides = array<i32>} : memref<72x256xf32, #tpu.memory_space<vmem>>, vector<8x256xf32>,
    %c0_38 = arith.constant 0 : index
    %c0_39 = arith.constant 0 : index
    %63 = vector.load %arg7[%c0_38, %c0_39] : memref<72x256xf32, #tpu.memory_space<vmem>>, vector<72x256xf32>
    %cst_40 = arith.constant dense<0.000000e+00> : vector<4x256xf32>
    %64 = tpu.matmul %15, %63, %cst_40 {dimension_numbers = #tpu.dot_dimension_numbers<[1], [0], [0], [1], [0, 0, 1, 1], [], []>} : vector<4x72xf32>, vector<72x256xf32>, vector<4x256xf32> -> vector<4x256xf32>
    %c4_41 = arith.constant 4 : index
    %c0_42 = arith.constant 0 : index
    %65 = vector.load %arg6[%c4_41, %c0_42] : memref<16x256xf32, #tpu.memory_space<vmem>>, vector<4x256xf32>
    tpu.vector_store %arg6[%c4_41, %c0_42], %64 {strides = array<i32>} : memref<16x256xf32, #tpu.memory_space<vmem>>, vector<4x256xf32>,
    %c40_43 = arith.constant 40 : index
    %c0_44 = arith.constant 0 : index
    %66 = vector.load %arg2[%c40_43, %c0_44] : memref<120x1xf32, #tpu.memory_space<vmem>>, vector<16x1xf32>
    %c56_45 = arith.constant 56 : index
    %c0_46 = arith.constant 0 : index
    %67 = vector.load %arg2[%c56_45, %c0_46] : memref<120x1xf32, #tpu.memory_space<vmem>>, vector<16x1xf32>
    %c72 = arith.constant 72 : index
    %c0_47 = arith.constant 0 : index
    %68 = vector.load %arg2[%c72, %c0_47] : memref<120x1xf32, #tpu.memory_space<vmem>>, vector<8x1xf32>
    %c8_48 = arith.constant 8 : index
    %c0_49 = arith.constant 0 : index
    %69 = vector.load %arg3[%c8_48, %c0_49] : memref<24x16xf32, #tpu.memory_space<vmem>>, vector<8x16xf32>
    %c4_50 = arith.constant 4 : index
    %c0_51 = arith.constant 0 : index
    %70 = vector.load %arg4[%c4_50, %c0_51] : memref<12x72xf32, #tpu.memory_space<vmem>>, vector<4x72xf32>
    %c0_52 = arith.constant 0 : index
    %c0_53 = arith.constant 0 : index
    %71 = vector.load %arg6[%c0_52, %c0_53] : memref<16x256xf32, #tpu.memory_space<vmem>>, vector<16x256xf32>
    %72 = vector.broadcast %66 : vector<16x1xf32> to vector<16x256xf32>
    %73 = arith.mulf %71, %72 : vector<16x256xf32>
    %74 = vector.broadcast %67 : vector<16x1xf32> to vector<16x256xf32>
    %75 = arith.addf %73, %74 : vector<16x256xf32>
    %cst_54 = arith.constant 0.000000e+00 : f32
    %76 = vector.broadcast %cst_54 : f32 to vector<16x256xf32>
    %77 = arith.maximumf %75, %76 : vector<16x256xf32>
    %cst_55 = arith.constant dense<0.000000e+00> : vector<8x256xf32>
    %78 = tpu.matmul %69, %77, %cst_55 {dimension_numbers = #tpu.dot_dimension_numbers<[1], [0], [0], [1], [0, 0, 1, 1], [], []>} : vector<8x16xf32>, vector<16x256xf32>, vector<8x256xf32> -> vector<8x256xf32>
    %79 = vector.broadcast %68 : vector<8x1xf32> to vector<8x256xf32>
    %80 = arith.addf %78, %79 : vector<8x256xf32>
    %cst_56 = arith.constant 0.000000e+00 : f32
    %81 = vector.broadcast %cst_56 : f32 to vector<8x256xf32>
    %82 = arith.maximumf %80, %81 : vector<8x256xf32>
    %c17_i32_57 = arith.constant 17 : i32
    %83 = tpu.dynamic_rotate %82 by %c17_i32_57 dim 1 : vector<8x256xf32>, i32 -> vector<8x256xf32>
    %84 = vector.broadcast %2 : vector<1x256xf32> to vector<8x256xf32>
    %85 = arith.mulf %83, %84 : vector<8x256xf32>
    %c0_58 = arith.constant 0 : index
    %c0_59 = arith.constant 0 : index
    %86 = vector.load %arg7[%c0_58, %c0_59] : memref<72x256xf32, #tpu.memory_space<vmem>>, vector<8x256xf32>
    tpu.vector_store %arg7[%c0_58, %c0_59], %85 {strides = array<i32>} : memref<72x256xf32, #tpu.memory_space<vmem>>, vector<8x256xf32>,
    %c16_i32_60 = arith.constant 16 : i32
    %87 = tpu.dynamic_rotate %82 by %c16_i32_60 dim 1 : vector<8x256xf32>, i32 -> vector<8x256xf32>
    %88 = vector.broadcast %3 : vector<1x256xf32> to vector<8x256xf32>
    %89 = arith.mulf %87, %88 : vector<8x256xf32>
    %c8_61 = arith.constant 8 : index
    %c0_62 = arith.constant 0 : index
    %90 = vector.load %arg7[%c8_61, %c0_62] : memref<72x256xf32, #tpu.memory_space<vmem>>, vector<8x256xf32>
    tpu.vector_store %arg7[%c8_61, %c0_62], %89 {strides = array<i32>} : memref<72x256xf32, #tpu.memory_space<vmem>>, vector<8x256xf32>,
    %c15_i32_63 = arith.constant 15 : i32
    %91 = tpu.dynamic_rotate %82 by %c15_i32_63 dim 1 : vector<8x256xf32>, i32 -> vector<8x256xf32>
    %92 = vector.broadcast %4 : vector<1x256xf32> to vector<8x256xf32>
    %93 = arith.mulf %91, %92 : vector<8x256xf32>
    %c16_64 = arith.constant 16 : index
    %c0_65 = arith.constant 0 : index
    %94 = vector.load %arg7[%c16_64, %c0_65] : memref<72x256xf32, #tpu.memory_space<vmem>>, vector<8x256xf32>
    tpu.vector_store %arg7[%c16_64, %c0_65], %93 {strides = array<i32>} : memref<72x256xf32, #tpu.memory_space<vmem>>, vector<8x256xf32>,
    %c1_i32_66 = arith.constant 1 : i32
    %95 = tpu.dynamic_rotate %82 by %c1_i32_66 dim 1 : vector<8x256xf32>, i32 -> vector<8x256xf32>
    %96 = vector.broadcast %5 : vector<1x256xf32> to vector<8x256xf32>
    %97 = arith.mulf %95, %96 : vector<8x256xf32>
    %c24_67 = arith.constant 24 : index
    %c0_68 = arith.constant 0 : index
    %98 = vector.load %arg7[%c24_67, %c0_68] : memref<72x256xf32, #tpu.memory_space<vmem>>, vector<8x256xf32>
    tpu.vector_store %arg7[%c24_67, %c0_68], %97 {strides = array<i32>} : memref<72x256xf32, #tpu.memory_space<vmem>>, vector<8x256xf32>,
    %99 = vector.broadcast %6 : vector<1x256xf32> to vector<8x256xf32>
    %100 = arith.mulf %82, %99 : vector<8x256xf32>
    %c32_69 = arith.constant 32 : index
    %c0_70 = arith.constant 0 : index
    %101 = vector.load %arg7[%c32_69, %c0_70] : memref<72x256xf32, #tpu.memory_space<vmem>>, vector<8x256xf32>
    tpu.vector_store %arg7[%c32_69, %c0_70], %100 {strides = array<i32>} : memref<72x256xf32, #tpu.memory_space<vmem>>, vector<8x256xf32>,
    %c255_i32_71 = arith.constant 255 : i32
    %102 = tpu.dynamic_rotate %82 by %c255_i32_71 dim 1 : vector<8x256xf32>, i32 -> vector<8x256xf32>
    %103 = vector.broadcast %7 : vector<1x256xf32> to vector<8x256xf32>
    %104 = arith.mulf %102, %103 : vector<8x256xf32>
    %c40_72 = arith.constant 40 : index
    %c0_73 = arith.constant 0 : index
    %105 = vector.load %arg7[%c40_72, %c0_73] : memref<72x256xf32, #tpu.memory_space<vmem>>, vector<8x256xf32>
    tpu.vector_store %arg7[%c40_72, %c0_73], %104 {strides = array<i32>} : memref<72x256xf32, #tpu.memory_space<vmem>>, vector<8x256xf32>,
    %c241_i32_74 = arith.constant 241 : i32
    %106 = tpu.dynamic_rotate %82 by %c241_i32_74 dim 1 : vector<8x256xf32>, i32 -> vector<8x256xf32>
    %107 = vector.broadcast %8 : vector<1x256xf32> to vector<8x256xf32>
    %108 = arith.mulf %106, %107 : vector<8x256xf32>
    %c48_75 = arith.constant 48 : index
    %c0_76 = arith.constant 0 : index
    %109 = vector.load %arg7[%c48_75, %c0_76] : memref<72x256xf32, #tpu.memory_space<vmem>>, vector<8x256xf32>
    tpu.vector_store %arg7[%c48_75, %c0_76], %108 {strides = array<i32>} : memref<72x256xf32, #tpu.memory_space<vmem>>, vector<8x256xf32>,
    %c240_i32_77 = arith.constant 240 : i32
    %110 = tpu.dynamic_rotate %82 by %c240_i32_77 dim 1 : vector<8x256xf32>, i32 -> vector<8x256xf32>
    %111 = vector.broadcast %9 : vector<1x256xf32> to vector<8x256xf32>
    %112 = arith.mulf %110, %111 : vector<8x256xf32>
    %c56_78 = arith.constant 56 : index
    %c0_79 = arith.constant 0 : index
    %113 = vector.load %arg7[%c56_78, %c0_79] : memref<72x256xf32, #tpu.memory_space<vmem>>, vector<8x256xf32>
    tpu.vector_store %arg7[%c56_78, %c0_79], %112 {strides = array<i32>} : memref<72x256xf32, #tpu.memory_space<vmem>>, vector<8x256xf32>,
    %c239_i32_80 = arith.constant 239 : i32
    %114 = tpu.dynamic_rotate %82 by %c239_i32_80 dim 1 : vector<8x256xf32>, i32 -> vector<8x256xf32>
    %115 = vector.broadcast %10 : vector<1x256xf32> to vector<8x256xf32>
    %116 = arith.mulf %114, %115 : vector<8x256xf32>
    %c64_81 = arith.constant 64 : index
    %c0_82 = arith.constant 0 : index
    %117 = vector.load %arg7[%c64_81, %c0_82] : memref<72x256xf32, #tpu.memory_space<vmem>>, vector<8x256xf32>
    tpu.vector_store %arg7[%c64_81, %c0_82], %116 {strides = array<i32>} : memref<72x256xf32, #tpu.memory_space<vmem>>, vector<8x256xf32>,
    %c0_83 = arith.constant 0 : index
    %c0_84 = arith.constant 0 : index
    %118 = vector.load %arg7[%c0_83, %c0_84] : memref<72x256xf32, #tpu.memory_space<vmem>>, vector<72x256xf32>
    %cst_85 = arith.constant dense<0.000000e+00> : vector<4x256xf32>
    %119 = tpu.matmul %70, %118, %cst_85 {dimension_numbers = #tpu.dot_dimension_numbers<[1], [0], [0], [1], [0, 0, 1, 1], [], []>} : vector<4x72xf32>, vector<72x256xf32>, vector<4x256xf32> -> vector<4x256xf32>
    %c8_86 = arith.constant 8 : index
    %c0_87 = arith.constant 0 : index
    %120 = vector.load %arg6[%c8_86, %c0_87] : memref<16x256xf32, #tpu.memory_space<vmem>>, vector<4x256xf32>
    tpu.vector_store %arg6[%c8_86, %c0_87], %119 {strides = array<i32>} : memref<16x256xf32, #tpu.memory_space<vmem>>, vector<4x256xf32>,
    %c80 = arith.constant 80 : index
    %c0_88 = arith.constant 0 : index
    %121 = vector.load %arg2[%c80, %c0_88] : memref<120x1xf32, #tpu.memory_space<vmem>>, vector<16x1xf32>
    %c96 = arith.constant 96 : index
    %c0_89 = arith.constant 0 : index
    %122 = vector.load %arg2[%c96, %c0_89] : memref<120x1xf32, #tpu.memory_space<vmem>>, vector<16x1xf32>
    %c112 = arith.constant 112 : index
    %c0_90 = arith.constant 0 : index
    %123 = vector.load %arg2[%c112, %c0_90] : memref<120x1xf32, #tpu.memory_space<vmem>>, vector<8x1xf32>
    %c16_91 = arith.constant 16 : index
    %c0_92 = arith.constant 0 : index
    %124 = vector.load %arg3[%c16_91, %c0_92] : memref<24x16xf32, #tpu.memory_space<vmem>>, vector<8x16xf32>
    %c8_93 = arith.constant 8 : index
    %c0_94 = arith.constant 0 : index
    %125 = vector.load %arg4[%c8_93, %c0_94] : memref<12x72xf32, #tpu.memory_space<vmem>>, vector<4x72xf32>
    %c0_95 = arith.constant 0 : index
    %c0_96 = arith.constant 0 : index
    %126 = vector.load %arg6[%c0_95, %c0_96] : memref<16x256xf32, #tpu.memory_space<vmem>>, vector<16x256xf32>
    %127 = vector.broadcast %121 : vector<16x1xf32> to vector<16x256xf32>
    %128 = arith.mulf %126, %127 : vector<16x256xf32>
    %129 = vector.broadcast %122 : vector<16x1xf32> to vector<16x256xf32>
    %130 = arith.addf %128, %129 : vector<16x256xf32>
    %cst_97 = arith.constant 0.000000e+00 : f32
    %131 = vector.broadcast %cst_97 : f32 to vector<16x256xf32>
    %132 = arith.maximumf %130, %131 : vector<16x256xf32>
    %cst_98 = arith.constant dense<0.000000e+00> : vector<8x256xf32>
    %133 = tpu.matmul %124, %132, %cst_98 {dimension_numbers = #tpu.dot_dimension_numbers<[1], [0], [0], [1], [0, 0, 1, 1], [], []>} : vector<8x16xf32>, vector<16x256xf32>, vector<8x256xf32> -> vector<8x256xf32>
    %134 = vector.broadcast %123 : vector<8x1xf32> to vector<8x256xf32>
    %135 = arith.addf %133, %134 : vector<8x256xf32>
    %cst_99 = arith.constant 0.000000e+00 : f32
    %136 = vector.broadcast %cst_99 : f32 to vector<8x256xf32>
    %137 = arith.maximumf %135, %136 : vector<8x256xf32>
    %c17_i32_100 = arith.constant 17 : i32
    %138 = tpu.dynamic_rotate %137 by %c17_i32_100 dim 1 : vector<8x256xf32>, i32 -> vector<8x256xf32>
    %139 = vector.broadcast %2 : vector<1x256xf32> to vector<8x256xf32>
    %140 = arith.mulf %138, %139 : vector<8x256xf32>
    %c0_101 = arith.constant 0 : index
    %c0_102 = arith.constant 0 : index
    %141 = vector.load %arg7[%c0_101, %c0_102] : memref<72x256xf32, #tpu.memory_space<vmem>>, vector<8x256xf32>
    tpu.vector_store %arg7[%c0_101, %c0_102], %140 {strides = array<i32>} : memref<72x256xf32, #tpu.memory_space<vmem>>, vector<8x256xf32>,
    %c16_i32_103 = arith.constant 16 : i32
    %142 = tpu.dynamic_rotate %137 by %c16_i32_103 dim 1 : vector<8x256xf32>, i32 -> vector<8x256xf32>
    %143 = vector.broadcast %3 : vector<1x256xf32> to vector<8x256xf32>
    %144 = arith.mulf %142, %143 : vector<8x256xf32>
    %c8_104 = arith.constant 8 : index
    %c0_105 = arith.constant 0 : index
    %145 = vector.load %arg7[%c8_104, %c0_105] : memref<72x256xf32, #tpu.memory_space<vmem>>, vector<8x256xf32>
    tpu.vector_store %arg7[%c8_104, %c0_105], %144 {strides = array<i32>} : memref<72x256xf32, #tpu.memory_space<vmem>>, vector<8x256xf32>,
    %c15_i32_106 = arith.constant 15 : i32
    %146 = tpu.dynamic_rotate %137 by %c15_i32_106 dim 1 : vector<8x256xf32>, i32 -> vector<8x256xf32>
    %147 = vector.broadcast %4 : vector<1x256xf32> to vector<8x256xf32>
    %148 = arith.mulf %146, %147 : vector<8x256xf32>
    %c16_107 = arith.constant 16 : index
    %c0_108 = arith.constant 0 : index
    %149 = vector.load %arg7[%c16_107, %c0_108] : memref<72x256xf32, #tpu.memory_space<vmem>>, vector<8x256xf32>
    tpu.vector_store %arg7[%c16_107, %c0_108], %148 {strides = array<i32>} : memref<72x256xf32, #tpu.memory_space<vmem>>, vector<8x256xf32>,
    %c1_i32_109 = arith.constant 1 : i32
    %150 = tpu.dynamic_rotate %137 by %c1_i32_109 dim 1 : vector<8x256xf32>, i32 -> vector<8x256xf32>
    %151 = vector.broadcast %5 : vector<1x256xf32> to vector<8x256xf32>
    %152 = arith.mulf %150, %151 : vector<8x256xf32>
    %c24_110 = arith.constant 24 : index
    %c0_111 = arith.constant 0 : index
    %153 = vector.load %arg7[%c24_110, %c0_111] : memref<72x256xf32, #tpu.memory_space<vmem>>, vector<8x256xf32>
    tpu.vector_store %arg7[%c24_110, %c0_111], %152 {strides = array<i32>} : memref<72x256xf32, #tpu.memory_space<vmem>>, vector<8x256xf32>,
    %154 = vector.broadcast %6 : vector<1x256xf32> to vector<8x256xf32>
    %155 = arith.mulf %137, %154 : vector<8x256xf32>
    %c32_112 = arith.constant 32 : index
    %c0_113 = arith.constant 0 : index
    %156 = vector.load %arg7[%c32_112, %c0_113] : memref<72x256xf32, #tpu.memory_space<vmem>>, vector<8x256xf32>
    tpu.vector_store %arg7[%c32_112, %c0_113], %155 {strides = array<i32>} : memref<72x256xf32, #tpu.memory_space<vmem>>, vector<8x256xf32>,
    %c255_i32_114 = arith.constant 255 : i32
    %157 = tpu.dynamic_rotate %137 by %c255_i32_114 dim 1 : vector<8x256xf32>, i32 -> vector<8x256xf32>
    %158 = vector.broadcast %7 : vector<1x256xf32> to vector<8x256xf32>
    %159 = arith.mulf %157, %158 : vector<8x256xf32>
    %c40_115 = arith.constant 40 : index
    %c0_116 = arith.constant 0 : index
    %160 = vector.load %arg7[%c40_115, %c0_116] : memref<72x256xf32, #tpu.memory_space<vmem>>, vector<8x256xf32>
    tpu.vector_store %arg7[%c40_115, %c0_116], %159 {strides = array<i32>} : memref<72x256xf32, #tpu.memory_space<vmem>>, vector<8x256xf32>,
    %c241_i32_117 = arith.constant 241 : i32
    %161 = tpu.dynamic_rotate %137 by %c241_i32_117 dim 1 : vector<8x256xf32>, i32 -> vector<8x256xf32>
    %162 = vector.broadcast %8 : vector<1x256xf32> to vector<8x256xf32>
    %163 = arith.mulf %161, %162 : vector<8x256xf32>
    %c48_118 = arith.constant 48 : index
    %c0_119 = arith.constant 0 : index
    %164 = vector.load %arg7[%c48_118, %c0_119] : memref<72x256xf32, #tpu.memory_space<vmem>>, vector<8x256xf32>
    tpu.vector_store %arg7[%c48_118, %c0_119], %163 {strides = array<i32>} : memref<72x256xf32, #tpu.memory_space<vmem>>, vector<8x256xf32>,
    %c240_i32_120 = arith.constant 240 : i32
    %165 = tpu.dynamic_rotate %137 by %c240_i32_120 dim 1 : vector<8x256xf32>, i32 -> vector<8x256xf32>
    %166 = vector.broadcast %9 : vector<1x256xf32> to vector<8x256xf32>
    %167 = arith.mulf %165, %166 : vector<8x256xf32>
    %c56_121 = arith.constant 56 : index
    %c0_122 = arith.constant 0 : index
    %168 = vector.load %arg7[%c56_121, %c0_122] : memref<72x256xf32, #tpu.memory_space<vmem>>, vector<8x256xf32>
    tpu.vector_store %arg7[%c56_121, %c0_122], %167 {strides = array<i32>} : memref<72x256xf32, #tpu.memory_space<vmem>>, vector<8x256xf32>,
    %c239_i32_123 = arith.constant 239 : i32
    %169 = tpu.dynamic_rotate %137 by %c239_i32_123 dim 1 : vector<8x256xf32>, i32 -> vector<8x256xf32>
    %170 = vector.broadcast %10 : vector<1x256xf32> to vector<8x256xf32>
    %171 = arith.mulf %169, %170 : vector<8x256xf32>
    %c64_124 = arith.constant 64 : index
    %c0_125 = arith.constant 0 : index
    %172 = vector.load %arg7[%c64_124, %c0_125] : memref<72x256xf32, #tpu.memory_space<vmem>>, vector<8x256xf32>
    tpu.vector_store %arg7[%c64_124, %c0_125], %171 {strides = array<i32>} : memref<72x256xf32, #tpu.memory_space<vmem>>, vector<8x256xf32>,
    %c0_126 = arith.constant 0 : index
    %c0_127 = arith.constant 0 : index
    %173 = vector.load %arg7[%c0_126, %c0_127] : memref<72x256xf32, #tpu.memory_space<vmem>>, vector<72x256xf32>
    %cst_128 = arith.constant dense<0.000000e+00> : vector<4x256xf32>
    %174 = tpu.matmul %125, %173, %cst_128 {dimension_numbers = #tpu.dot_dimension_numbers<[1], [0], [0], [1], [0, 0, 1, 1], [], []>} : vector<4x72xf32>, vector<72x256xf32>, vector<4x256xf32> -> vector<4x256xf32>
    %c12 = arith.constant 12 : index
    %c0_129 = arith.constant 0 : index
    %175 = vector.load %arg6[%c12, %c0_129] : memref<16x256xf32, #tpu.memory_space<vmem>>, vector<4x256xf32>
    tpu.vector_store %arg6[%c12, %c0_129], %174 {strides = array<i32>} : memref<16x256xf32, #tpu.memory_space<vmem>>, vector<4x256xf32>,
    return
  }
  func.func @transform_0(%arg0: i32) -> (i32, i32) {
    %c0_i32 = arith.constant 0 : i32
    %c0_i32_0 = arith.constant 0 : i32
    return %c0_i32, %arg0 : i32, i32
  }
  func.func @transform_1(%arg0: i32) -> (i32, i32) {
    %c0_i32 = arith.constant 0 : i32
    %c0_i32_0 = arith.constant 0 : i32
    %c0_i32_1 = arith.constant 0 : i32
    return %c0_i32, %c0_i32_0 : i32, i32
  }
  func.func @transform_2(%arg0: i32) -> (i32, i32) {
    %c0_i32 = arith.constant 0 : i32
    %c0_i32_0 = arith.constant 0 : i32
    %c0_i32_1 = arith.constant 0 : i32
    return %c0_i32, %c0_i32_0 : i32, i32
  }
  func.func @transform_3(%arg0: i32) -> (i32, i32) {
    %c0_i32 = arith.constant 0 : i32
    %c0_i32_0 = arith.constant 0 : i32
    %c0_i32_1 = arith.constant 0 : i32
    return %c0_i32, %c0_i32_0 : i32, i32
  }
  func.func @transform_4(%arg0: i32) -> (i32, i32) {
    %c0_i32 = arith.constant 0 : i32
    %c0_i32_0 = arith.constant 0 : i32
    return %c0_i32, %arg0 : i32, i32
  }
  func.func @transform_5(%arg0: i32) -> (i32, i32) {
    %c0_i32 = arith.constant 0 : i32
    %c0_i32_0 = arith.constant 0 : i32
    return %c0_i32, %arg0 : i32, i32
  }
}

</mosaic_0001>

<llo_original>
// kernel: dense_block_forward.1
$region0: #{dense_block_forward.1}
  #allocation0 [shape = 'u32[]', space=smem, size = 0x4, offset = 0x4, fixed_abs, tag = 'smem constant byte address 0x4 - core index']
  #allocation1 [shape = 'u32[144,128]{1,0:T(1,128)}', space=vmem, size = 0x12000, scoped, tag = 'internal scratch']
  #allocation2 [shape = 'f32[72,256]{1,0:T(8,128)}', space=vmem, size = 0x12000, scoped, tag = 'scratch operand']
  %s0 = inlined_call_operand.vmem [shape: f32[16,512], index: 0, kind: input, shape index: {}]
  %s1 = inlined_call_operand.vmem [shape: f32[120,1], index: 1, kind: input, shape index: {}]
  %s2 = inlined_call_operand.vmem [shape: f32[24,16], index: 2, kind: input, shape index: {}]
  %s3 = inlined_call_operand.vmem [shape: f32[12,72], index: 3, kind: input, shape index: {}]
  %s4 = inlined_call_operand.vmem [shape: f32[16,512], index: 4, kind: input, shape index: {}]
  %s5 = inlined_call_operand.vmem [shape: f32[16,512], index: 5, kind: output, shape index: {}]
  %s6 = sld [smem:[#allocation0]]
  $region118: #{dense_block_forward.1} parent=0
    _
  %s8 = ssub.s32 1, %s6
  %s9 = scalar_select 0, %s8, %s6
  $region1: #{dense_block_forward.1} parent=0
    #allocation3 [shape = 'u8[32768]{0}', space=vmem, size = 0x8000, scoped, tag = 'input window, operand 0']
    #allocation4 [shape = 'u8[32768]{0}', space=vmem, size = 0x8000, scoped, tag = 'input window, operand 4']
    #allocation5 [shape = 'u8[32768]{0}', space=vmem, size = 0x8000, scoped, tag = 'output window, operand 0']
    loop: start=0, step=1, limit=4
    $region2: #{dense_block_forward.1} parent=1 // loop_pre_header
      _
    $region3: #{dense_block_forward.1} parent=1 // loop_header
      %s11 = sphi 0, %s15
      %p12 = scmp.ge.s32.totalorder %s11, 4
      %s21 = sphi 0, %s23
      %s24 = sphi 0, %s21
      %s25 = sphi 0, %s24
      %s41 = sphi 0, %s25
      %s45 = sphi 0, %s45
      %s47 = sphi 0, %s45
      %s48 = sphi 0, %s47
      %s62 = sphi 0, %s48
      %s66 = sphi 0, %s66
      %s68 = sphi 0, %s66
      %s69 = sphi 0, %s68
      %s83 = sphi 0, %s69
      %s87 = sphi 0, %s87
      %s89 = sphi 0, %s87
      %s90 = sphi 0, %s89
      %s104 = sphi 0, %s90
      %s110 = sphi 0, %s112
      %s113 = sphi 0, %s110
      %s114 = sphi 0, %s113
      %s130 = sphi 0, %s114
      %s136 = sphi 0, %s138
      %s139 = sphi 0, %s136
      %s140 = sphi 0, %s139
      %s156 = sphi 0, %s140
    $region4: #{dense_block_forward.1} parent=1 // loop_header_branch
      %14 = sbr.rel (%p12) target = $region8
    $region5: #{dense_block_forward.1} parent=1 // loop_body
      %s16 = ssub.s32 %s11, 1
      %s17 = ssub.s32 %s11, 2
      %s18 = sadd.s32 %s11, 1
      %s19 = ssub.s32 %s11, %s18
      %p20 = scmp.eq.s32.totalorder %s19, 0
      %s22 = sadd.s32 %s21, 1
      %s23 = scalar_select %p20, %s21, %s22
      %p26 = pneg %p20
      %p27 = scmp.eq.s32.totalorder %s11, 1
      %p28 = por %p26, %p27
      %p29 = scmp.ne.s32.totalorder %s21, %s24
      %p30 = scmp.eq.s32.totalorder %s11, 0
      %p31 = por %p29, %p30
      %p32 = scmp.ne.s32.totalorder %s21, %s24
      %p33 = scmp.eq.s32.totalorder %s16, 1
      %p34 = por %p32, %p33
      %p35 = scmp.ne.s32.totalorder %s24, %s25
      %p36 = scmp.eq.s32.totalorder %s16, 0
      %p37 = por %p35, %p36
      %p38 = scmp.ne.s32.totalorder %s24, %s25
      %p39 = scmp.eq.s32.totalorder %s17, 1
      %p40 = por %p38, %p39
      %p42 = scmp.ne.s32.totalorder %s25, %s41
      %p43 = scmp.eq.s32.totalorder %s17, 0
      %p44 = por %p42, %p43
      %s46 = sadd.s32 %s45, 1
      %p49 = scmp.eq.s32.totalorder %s11, 1
      %p50 = scmp.ne.s32.totalorder %s45, %s47
      %p51 = scmp.eq.s32.totalorder %s11, 0
      %p52 = por %p50, %p51
      %p53 = scmp.ne.s32.totalorder %s45, %s47
      %p54 = scmp.eq.s32.totalorder %s16, 1
      %p55 = por %p53, %p54
      %p56 = scmp.ne.s32.totalorder %s47, %s48
      %p57 = scmp.eq.s32.totalorder %s16, 0
      %p58 = por %p56, %p57
      %p59 = scmp.ne.s32.totalorder %s47, %s48
      %p60 = scmp.eq.s32.totalorder %s17, 1
      %p61 = por %p59, %p60
      %p63 = scmp.ne.s32.totalorder %s48, %s62
      %p64 = scmp.eq.s32.totalorder %s17, 0
      %p65 = por %p63, %p64
      %s67 = sadd.s32 %s66, 1
      %p70 = scmp.eq.s32.totalorder %s11, 1
      %p71 = scmp.ne.s32.totalorder %s66, %s68
      %p72 = scmp.eq.s32.totalorder %s11, 0
      %p73 = por %p71, %p72
      %p74 = scmp.ne.s32.totalorder %s66, %s68
      %p75 = scmp.eq.s32.totalorder %s16, 1
      %p76 = por %p74, %p75
      %p77 = scmp.ne.s32.totalorder %s68, %s69
      %p78 = scmp.eq.s32.totalorder %s16, 0
      %p79 = por %p77, %p78
      %p80 = scmp.ne.s32.totalorder %s68, %s69
      %p81 = scmp.eq.s32.totalorder %s17, 1
      %p82 = por %p80, %p81
      %p84 = scmp.ne.s32.totalorder %s69, %s83
      %p85 = scmp.eq.s32.totalorder %s17, 0
      %p86 = por %p84, %p85
      %s88 = sadd.s32 %s87, 1
      %p91 = scmp.eq.s32.totalorder %s11, 1
      %p92 = scmp.ne.s32.totalorder %s87, %s89
      %p93 = scmp.eq.s32.totalorder %s11, 0
      %p94 = por %p92, %p93
      %p95 = scmp.ne.s32.totalorder %s87, %s89
      %p96 = scmp.eq.s32.totalorder %s16, 1
      %p97 = por %p95, %p96
      %p98 = scmp.ne.s32.totalorder %s89, %s90
      %p99 = scmp.eq.s32.totalorder %s16, 0
      %p100 = por %p98, %p99
      %p101 = scmp.ne.s32.totalorder %s89, %s90
      %p102 = scmp.eq.s32.totalorder %s17, 1
      %p103 = por %p101, %p102
      %p105 = scmp.ne.s32.totalorder %s90, %s104
      %p106 = scmp.eq.s32.totalorder %s17, 0
      %p107 = por %p105, %p106
      %s108 = ssub.s32 %s11, %s18
      %p109 = scmp.eq.s32.totalorder %s108, 0
      %s111 = sadd.s32 %s110, 1
      %s112 = scalar_select %p109, %s110, %s111
      %p115 = pneg %p109
      %p116 = scmp.eq.s32.totalorder %s11, 1
      %p117 = por %p115, %p116
      %p118 = scmp.ne.s32.totalorder %s110, %s113
      %p119 = scmp.eq.s32.totalorder %s11, 0
      %p120 = por %p118, %p119
      %p121 = scmp.ne.s32.totalorder %s110, %s113
      %p122 = scmp.eq.s32.totalorder %s16, 1
      %p123 = por %p121, %p122
      %p124 = scmp.ne.s32.totalorder %s113, %s114
      %p125 = scmp.eq.s32.totalorder %s16, 0
      %p126 = por %p124, %p125
      %p127 = scmp.ne.s32.totalorder %s113, %s114
      %p128 = scmp.eq.s32.totalorder %s17, 1
      %p129 = por %p127, %p128
      %p131 = scmp.ne.s32.totalorder %s114, %s130
      %p132 = scmp.eq.s32.totalorder %s17, 0
      %p133 = por %p131, %p132
      %s134 = ssub.s32 %s11, %s18
      %p135 = scmp.eq.s32.totalorder %s134, 0
      %s137 = sadd.s32 %s136, 1
      %s138 = scalar_select %p135, %s136, %s137
      %p141 = pneg %p135
      %p142 = scmp.eq.s32.totalorder %s11, 1
      %p143 = por %p141, %p142
      %p144 = scmp.ne.s32.totalorder %s136, %s139
      %p145 = scmp.eq.s32.totalorder %s11, 0
      %p146 = por %p144, %p145
      %p147 = scmp.ne.s32.totalorder %s136, %s139
      %p148 = scmp.eq.s32.totalorder %s16, 1
      %p149 = por %p147, %p148
      %p150 = scmp.ne.s32.totalorder %s139, %s140
      %p151 = scmp.eq.s32.totalorder %s16, 0
      %p152 = por %p150, %p151
      %p153 = scmp.ne.s32.totalorder %s139, %s140
      %p154 = scmp.eq.s32.totalorder %s17, 1
      %p155 = por %p153, %p154
      %p157 = scmp.ne.s32.totalorder %s140, %s156
      %p158 = scmp.eq.s32.totalorder %s17, 0
      %p159 = por %p157, %p158
      %p160 = scmp.le.s32.totalorder 1, %s11
      %p161 = scmp.lt.s32.totalorder %s11, 3
      %p162 = pnand %p160, %p161
      %p163 = pneg %p162
      // Predicated region
      $region9: #{dense_block_forward.1} parent=5 // pred_check
        _
      $region10: #{dense_block_forward.1} parent=5 // pred_check_branch
        %165 = sbr.rel (%p162) target = $region12
      $region11: #{dense_block_forward.1} parent=5 // pred_region
        %s166 = ssub.s32 %s11, 1
        // Predicated region
        $region13: #{dense_block_forward.1} parent=11 // pred_check
          %p167 = pneg %p58
        $region14: #{dense_block_forward.1} parent=11 // pred_check_branch
          %169 = sbr.rel (%p167) target = $region16
        $region15: #{dense_block_forward.1} parent=11 // pred_region
          _
        $region16: #{dense_block_forward.1} parent=11 // pred_fallthru
          _
        // Predicated region
        $region17: #{dense_block_forward.1} parent=11 // pred_check
          %p170 = pneg %p79
        $region18: #{dense_block_forward.1} parent=11 // pred_check_branch
          %172 = sbr.rel (%p170) target = $region20
        $region19: #{dense_block_forward.1} parent=11 // pred_region
          _
        $region20: #{dense_block_forward.1} parent=11 // pred_fallthru
          _
        // Predicated region
        $region21: #{dense_block_forward.1} parent=11 // pred_check
          %p173 = pneg %p100
        $region22: #{dense_block_forward.1} parent=11 // pred_check_branch
          %175 = sbr.rel (%p173) target = $region24
        $region23: #{dense_block_forward.1} parent=11 // pred_region
          _
        $region24: #{dense_block_forward.1} parent=11 // pred_fallthru
          _
      $region12: #{dense_block_forward.1} parent=5 // pred_fallthru
        _
      %p176 = scmp.lt.s32.totalorder %s11, 2
      // Predicated region
      $region25: #{dense_block_forward.1} parent=5 // pred_check
        %p177 = pneg %p176
      $region26: #{dense_block_forward.1} parent=5 // pred_check_branch
        %179 = sbr.rel (%p177) target = $region28
      $region27: #{dense_block_forward.1} parent=5 // pred_region
        // Predicated region
        $region29: #{dense_block_forward.1} parent=27 // pred_check
          %p180 = pneg %p31
        $region30: #{dense_block_forward.1} parent=27 // pred_check_branch
          %182 = sbr.rel (%p180) target = $region32
        $region31: #{dense_block_forward.1} parent=27 // pred_region
          %s183 = sand.u32 %s21, 1
          %s184 = sand.u32 %s21, 1
          %s185 = smul.addr %s184, 32
          %s186 = scalar_lea.vmem [#allocation3], %s185
          %s187 = smul.u32 2, %s11
          %s188 = smul.addr %s187, 8
          %s189 = scalar_lea.vmem %s0, %s188
          // Predicated region
          $region33: #{dense_block_forward.1} parent=31 // pred_check
            _
          $region34: #{dense_block_forward.1} parent=31 // pred_check_branch
            %191 = sbr.rel (0) target = $region36
          $region35: #{dense_block_forward.1} parent=31 // pred_region
            // Predicated region
            $region37: #{dense_block_forward.1} parent=35 // pred_check
              _
            $region38: #{dense_block_forward.1} parent=35 // pred_check_branch
              %193 = sbr.rel (0) target = $region40
            $region39: #{dense_block_forward.1} parent=35 // pred_region
              loop: start=0, step=1, limit=1
              $region41: #{dense_block_forward.1} parent=39 // loop_pre_header
                _
              $region42: #{dense_block_forward.1} parent=39 // loop_header
                %s195 = sphi 0, %s199
                %p196 = scmp.ge.s32.totalorder %s195, 1
                %s200 = sphi %s189, %s189
                %s201 = sphi %s186, %s186
              $region43: #{dense_block_forward.1} parent=39 // loop_header_branch
                %198 = sbr.rel (%p196) target = $region47
              $region44: #{dense_block_forward.1} parent=39 // loop_body
                %v202 = vld [vmem:[%s200] sm:$0xff]
                %203 = vst [vmem:[%s201] sm:$0xff] %v202
                %v204 = vld [vmem:[%s200 + $0x8] sm:$0xff]
                %205 = vst [vmem:[%s201 + $0x8] sm:$0xff] %v204
                %v206 = vld [vmem:[%s200 + $0x20] sm:$0xff]
                %207 = vst [vmem:[%s201 + $0x10] sm:$0xff] %v206
                %v208 = vld [vmem:[%s200 + $0x28] sm:$0xff]
                %209 = vst [vmem:[%s201 + $0x18] sm:$0xff] %v208
              $region45: #{dense_block_forward.1} parent=39 // loop_footer
                %s199 = sadd.s32 1, %s195
              $region46: #{dense_block_forward.1} parent=39 // loop_footer_branch
                %194 = sbr.rel target = $region42
              $region47: #{dense_block_forward.1} parent=39 // loop_exit
                _
            $region40: #{dense_block_forward.1} parent=35 // pred_fallthru
              _
            // Predicated region
            $region48: #{dense_block_forward.1} parent=35 // pred_check
              _
            $region49: #{dense_block_forward.1} parent=35 // pred_check_branch
              %211 = sbr.rel target = $region51
            $region50: #{dense_block_forward.1} parent=35 // pred_region
              _
            $region51: #{dense_block_forward.1} parent=35 // pred_fallthru
              _
          $region36: #{dense_block_forward.1} parent=31 // pred_fallthru
            _
          %212 = vnop
        $region32: #{dense_block_forward.1} parent=27 // pred_fallthru
          _
        // Predicated region
        $region52: #{dense_block_forward.1} parent=27 // pred_check
          %p213 = pneg %p120
        $region53: #{dense_block_forward.1} parent=27 // pred_check_branch
          %215 = sbr.rel (%p213) target = $region55
        $region54: #{dense_block_forward.1} parent=27 // pred_region
          %s216 = sand.u32 %s110, 1
          %s217 = sand.u32 %s110, 1
          %s218 = smul.addr %s217, 32
          %s219 = scalar_lea.vmem [#allocation4], %s218
          %s220 = smul.u32 2, %s11
          %s221 = smul.addr %s220, 8
          %s222 = scalar_lea.vmem %s4, %s221
          // Predicated region
          $region56: #{dense_block_forward.1} parent=54 // pred_check
            _
          $region57: #{dense_block_forward.1} parent=54 // pred_check_branch
            %224 = sbr.rel (0) target = $region59
          $region58: #{dense_block_forward.1} parent=54 // pred_region
            // Predicated region
            $region60: #{dense_block_forward.1} parent=58 // pred_check
              _
            $region61: #{dense_block_forward.1} parent=58 // pred_check_branch
              %226 = sbr.rel (0) target = $region63
            $region62: #{dense_block_forward.1} parent=58 // pred_region
              loop: start=0, step=1, limit=1
              $region64: #{dense_block_forward.1} parent=62 // loop_pre_header
                _
              $region65: #{dense_block_forward.1} parent=62 // loop_header
                %s228 = sphi 0, %s232
                %p229 = scmp.ge.s32.totalorder %s228, 1
                %s233 = sphi %s222, %s222
                %s234 = sphi %s219, %s219
              $region66: #{dense_block_forward.1} parent=62 // loop_header_branch
                %231 = sbr.rel (%p229) target = $region70
              $region67: #{dense_block_forward.1} parent=62 // loop_body
                %v235 = vld [vmem:[%s233] sm:$0xff]
                %236 = vst [vmem:[%s234] sm:$0xff] %v235
                %v237 = vld [vmem:[%s233 + $0x8] sm:$0xff]
                %238 = vst [vmem:[%s234 + $0x8] sm:$0xff] %v237
                %v239 = vld [vmem:[%s233 + $0x20] sm:$0xff]
                %240 = vst [vmem:[%s234 + $0x10] sm:$0xff] %v239
                %v241 = vld [vmem:[%s233 + $0x28] sm:$0xff]
                %242 = vst [vmem:[%s234 + $0x18] sm:$0xff] %v241
              $region68: #{dense_block_forward.1} parent=62 // loop_footer
                %s232 = sadd.s32 1, %s228
              $region69: #{dense_block_forward.1} parent=62 // loop_footer_branch
                %227 = sbr.rel target = $region65
              $region70: #{dense_block_forward.1} parent=62 // loop_exit
                _
            $region63: #{dense_block_forward.1} parent=58 // pred_fallthru
              _
            // Predicated region
            $region71: #{dense_block_forward.1} parent=58 // pred_check
              _
            $region72: #{dense_block_forward.1} parent=58 // pred_check_branch
              %244 = sbr.rel target = $region74
            $region73: #{dense_block_forward.1} parent=58 // pred_region
              _
            $region74: #{dense_block_forward.1} parent=58 // pred_fallthru
              _
          $region59: #{dense_block_forward.1} parent=54 // pred_fallthru
            _
          %245 = vnop
        $region55: #{dense_block_forward.1} parent=27 // pred_fallthru
          _
      $region28: #{dense_block_forward.1} parent=5 // pred_fallthru
        _
      %p246 = scmp.le.s32.totalorder 1, %s11
      %p247 = scmp.lt.s32.totalorder %s11, 3
      %p248 = pnand %p246, %p247
      %p249 = pneg %p248
      // Predicated region
      $region75: #{dense_block_forward.1} parent=5 // pred_check
        _
      $region76: #{dense_block_forward.1} parent=5 // pred_check_branch
        %251 = sbr.rel (%p248) target = $region78
      $region77: #{dense_block_forward.1} parent=5 // pred_region
        %s252 = ssub.s32 %s11, 1
        %s253 = sand.u32 %s24, 1
        %s254 = sand.u32 %s24, 1
        %s255 = smul.addr %s254, 32
        %s256 = scalar_lea.vmem [#allocation3], %s255
        // Predicated region
        $region79: #{dense_block_forward.1} parent=77 // pred_check
          %p257 = pneg %p37
        $region80: #{dense_block_forward.1} parent=77 // pred_check_branch
          %259 = sbr.rel (%p257) target = $region82
        $region81: #{dense_block_forward.1} parent=77 // pred_region
          _
        $region82: #{dense_block_forward.1} parent=77 // pred_fallthru
          _
        %s260 = sand.u32 %s113, 1
        %s261 = sand.u32 %s113, 1
        %s262 = smul.addr %s261, 32
        %s263 = scalar_lea.vmem [#allocation4], %s262
        // Predicated region
        $region83: #{dense_block_forward.1} parent=77 // pred_check
          %p264 = pneg %p126
        $region84: #{dense_block_forward.1} parent=77 // pred_check_branch
          %266 = sbr.rel (%p264) target = $region86
        $region85: #{dense_block_forward.1} parent=77 // pred_region
          _
        $region86: #{dense_block_forward.1} parent=77 // pred_fallthru
          _
        %s267 = sand.u32 %s24, 1
        %s268 = sand.u32 %s24, 1
        %s269 = smul.addr %s268, 32
        %s270 = scalar_lea.vmem [#allocation3], %s269
        %p271 = pneg %p37
        %p272 = pneg %p34
        %p273 = pneg %p58
        %p274 = pneg %p55
        %p275 = pneg %p79
        %p276 = pneg %p76
        %p277 = pneg %p100
        %p278 = pneg %p97
        %s279 = sand.u32 %s113, 1
        %s280 = sand.u32 %s113, 1
        %s281 = smul.addr %s280, 32
        %s282 = scalar_lea.vmem [#allocation4], %s281
        %p283 = pneg %p126
        %p284 = pneg %p123
        %p285 = pneg %p152
        %p286 = pneg %p149
        %s287 = sand.u32 %s139, 1
        %s288 = sand.u32 %s139, 1
        %s289 = smul.addr %s288, 32
        %s290 = scalar_lea.vmem [#allocation5], %s289
        %s291 = smul.u32 2, %s16
        %s292 = smul.u32 2, %s16
        %s293 = smul.u32 2, %s16
        %v294 = vld [vmem:[%s256] sm:$0xff]
        %v295 = vld [vmem:[%s256 + $0x8] sm:$0xff]
        %v296 = vld [vmem:[%s256 + $0x10] sm:$0xff]
        %v297 = vld [vmem:[%s256 + $0x18] sm:$0xff]
        %298 = vst [vmem:[%s290] sm:$0xff] %v294
        %299 = vst [vmem:[%s290 + $0x8] sm:$0xff] %v295
        %300 = vst [vmem:[%s290 + $0x10] sm:$0xff] %v296
        %301 = vst [vmem:[%s290 + $0x18] sm:$0xff] %v297
        %v302 = vld [vmem:[%s263] ss:$8 sm:$0x3]
        %s303 = scalar_lea.vmem %s263, 1 [#allocation4]
        %v304 = vld [vmem:[%s303] ss:$8 sm:$0x3]
        %s305 = scalar_lea.vmem %s263, 2 [#allocation4]
        %v306 = vld [vmem:[%s305] ss:$8 sm:$0x3]
        %s307 = scalar_lea.vmem %s263, 3 [#allocation4]
        %v308 = vld [vmem:[%s307] ss:$8 sm:$0x3]
        %s309 = scalar_lea.vmem %s263, 4 [#allocation4]
        %v310 = vld [vmem:[%s309] ss:$8 sm:$0x3]
        %s311 = scalar_lea.vmem %s263, 5 [#allocation4]
        %v312 = vld [vmem:[%s311] ss:$8 sm:$0x3]
        %s313 = scalar_lea.vmem %s263, 6 [#allocation4]
        %v314 = vld [vmem:[%s313] ss:$8 sm:$0x3]
        %s315 = scalar_lea.vmem %s263, 7 [#allocation4]
        %v316 = vld [vmem:[%s315] ss:$8 sm:$0x3]
        %s317 = scalar_lea.vmem %s263, 16 [#allocation4]
        %v318 = vld [vmem:[%s317] ss:$8 sm:$0x3]
        %v319 = vld [vmem:[%s1] sm:$0xff]
        %v320 = vld [vmem:[%s1 + $0x8] sm:$0xff]
        %v321 = vld [vmem:[%s1 + $0x10] sm:$0xff]
        %v322 = vld [vmem:[%s1 + $0x18] sm:$0xff]
        %v323 = vld [vmem:[%s1 + $0x20] sm:$0xff]
        %v324 = vld [vmem:[%s2] sm:$0xff]
        %v325 = vld [vmem:[%s3] sm:$0xf]
        %v326 = vld [vmem:[%s290] sm:$0xff]
        %v327 = vld [vmem:[%s290 + $0x8] sm:$0xff]
        %v328 = vld [vmem:[%s290 + $0x10] sm:$0xff]
        %v329 = vld [vmem:[%s290 + $0x18] sm:$0xff]
        %331 = vset.pattern.permute.xlu0 0
        %332 = vperm.xlu0 %331, %v319
        %v333 = vpop.permute.xlu0 %332
        %336 = vset.pattern.permute.xlu0 0
        %337 = vperm.xlu0 %336, %v320
        %v338 = vpop.permute.xlu0 %337
        %v340 = vmul.f32 %v326, %v333
        %v341 = vmul.f32 %v327, %v333
        %v342 = vmul.f32 %v328, %v338
        %v343 = vmul.f32 %v329, %v338
        %345 = vset.pattern.permute.xlu0 0
        %346 = vperm.xlu0 %345, %v321
        %v347 = vpop.permute.xlu0 %346
        %350 = vset.pattern.permute.xlu0 0
        %351 = vperm.xlu0 %350, %v322
        %v352 = vpop.permute.xlu0 %351
        %v354 = vadd.f32 %v340, %v347
        %v355 = vadd.f32 %v341, %v347
        %v356 = vadd.f32 %v342, %v352
        %v357 = vadd.f32 %v343, %v352
        %v358 = vmax.f32 %v354, 0.0
        %v359 = vmax.f32 %v355, 0.0
        %v360 = vmax.f32 %v356, 0.0
        %v361 = vmax.f32 %v357, 0.0
        %363 = vset.pattern.permute.xlu0 0
        %364 = vperm.xlu0 %363, %v323
        %v365 = vpop.permute.xlu0 %364
        %vm367 = vcmask 130048
        %v369 = vsel %vm367, %v324, 0
        %371 = vmatprep.subr.mxu0 %v359
        %372 = vmatpush1.msra.mxu0 %v358
        %373 = vmatprep.subr.mxu0 %v361
        %374 = vmatpush1.msra.mxu0 %v360
        %375 = vmatprep.subr.mxu0 0.0
        %376 = vmatpush1.msra.mxu0 0.0
        %377 = vmatprep.subr.mxu0 0.0
        %378 = vmatpush1.msra.mxu0 0.0
        %379 = vmatprep.subr.mxu0 0.0
        %380 = vmatpush1.msra.mxu0 0.0
        %381 = vmatprep.subr.mxu0 0.0
        %382 = vmatpush1.msra.mxu0 0.0
        %383 = vmatprep.subr.mxu0 0.0
        %384 = vmatpush1.msra.mxu0 0.0
        %385 = vmatprep.subr.mxu0 0.0
        %386 = vmatpush1.msra.mxu0 0.0
        %387 = vmatprep.subr.mxu0 0.0
        %388 = vmatpush1.msra.mxu0 0.0
        %389 = vmatprep.subr.mxu0 0.0
        %390 = vmatpush1.msra.mxu0 0.0
        %391 = vmatprep.subr.mxu0 0.0
        %392 = vmatpush1.msra.mxu0 0.0
        %393 = vmatprep.subr.mxu0 0.0
        %394 = vmatpush1.msra.mxu0 0.0
        %395 = vmatprep.subr.mxu0 0.0
        %396 = vmatpush1.msra.mxu0 0.0
        %397 = vmatprep.subr.mxu0 0.0
        %398 = vmatpush1.msra.mxu0 0.0
        %399 = vmatprep.subr.mxu0 0.0
        %400 = vmatpush1.msra.mxu0 0.0
        %401 = vmatprep.subr.mxu0 0.0
        %402 = vmatpush1.msra.mxu0 0.0
        %403 = vmatprep.subr.mxu0 0.0
        %404 = vmatpush1.msra.mxu0 0.0
        %405 = vmatprep.subr.mxu0 0.0
        %406 = vmatpush1.msra.mxu0 0.0
        %407 = vmatprep.subr.mxu0 0.0
        %408 = vmatpush1.msra.mxu0 0.0
        %409 = vmatprep.subr.mxu0 0.0
        %410 = vmatpush1.msra.mxu0 0.0
        %411 = vmatprep.subr.mxu0 0.0
        %412 = vmatpush1.msra.mxu0 0.0
        %413 = vmatprep.subr.mxu0 0.0
        %414 = vmatpush1.msra.mxu0 0.0
        %415 = vmatprep.subr.mxu0 0.0
        %416 = vmatpush1.msra.mxu0 0.0
        %417 = vmatprep.subr.mxu0 0.0
        %418 = vmatpush1.msra.mxu0 0.0
        %419 = vmatprep.subr.mxu0 0.0
        %420 = vmatpush1.msra.mxu0 0.0
        %421 = vmatprep.subr.mxu0 0.0
        %422 = vmatpush1.msra.mxu0 0.0
        %423 = vmatprep.subr.mxu0 0.0
        %424 = vmatpush1.msra.mxu0 0.0
        %425 = vmatprep.subr.mxu0 0.0
        %426 = vmatpush1.msra.mxu0 0.0
        %427 = vmatprep.subr.mxu0 0.0
        %428 = vmatpush1.msra.mxu0 0.0
        %429 = vmatprep.subr.mxu0 0.0
        %430 = vmatpush1.msra.mxu0 0.0
        %431 = vmatprep.subr.mxu0 0.0
        %432 = vmatpush1.msra.mxu0 0.0
        %433 = vmatprep.subr.mxu0 0.0
        %434 = vmatpush1.msra.mxu0 0.0
        %435 = vmatprep.mubr.f32.mxu0 0.0
        %436 = vmatmul.mubr.f32.gmra.mrb[0].mxu0 %v369
        %v437 = vpop.f32.mrb[0].mxu0
        %v438 = vadd.f32 %v365, %v437
        %v439 = vpop.f32.mrb[0].mxu0
        %v440 = vadd.f32 %v365, %v439
        %441 = vdwg.mxu0
        %v442 = vmax.f32 %v438, 0.0
        %v443 = vmax.f32 %v440, 0.0
        %444 = vrot.lane.b32.xlu0 %v442, 17
        %v445 = vpop.permute.xlu0 %444
        %446 = vrot.lane.b32.xlu0 %v443, 17
        %v447 = vpop.permute.xlu0 %446
        %v448 = vlaneseq
        %v449 = vand.u32 %v448, 127
        %vm450 = vcmp.lt.s32.totalorder %v449, 17
        %v451 = vsel %vm450, %v445, %v447
        %v452 = vsel %vm450, %v447, %v445
        %v454 = vlaneseq
        %v455 = vshrl.u32 %v454, 7
        %v456 = vsub.s32 0, %v455
        %v457 = vrot.slane %v302, %v456
        %v458 = vlaneseq
        %v459 = vshrl.u32 %v458, 7
        %v460 = vsub.s32 1, %v459
        %v461 = vrot.slane %v302, %v460
        %v464 = vmul.f32 %v452, %v457
        %v465 = vmul.f32 %v451, %v461
        %466 = vst [vmem:[#allocation2] sm:$0xff] %v464
        %467 = vst [vmem:[#allocation2 + $0x8] sm:$0xff] %v465
        %468 = vrot.lane.b32.xlu0 %v442, 16
        %v469 = vpop.permute.xlu0 %468
        %470 = vrot.lane.b32.xlu0 %v443, 16
        %v471 = vpop.permute.xlu0 %470
        %vm472 = vcmp.lt.s32.totalorder %v449, 16
        %v473 = vsel %vm472, %v469, %v471
        %v474 = vsel %vm472, %v471, %v469
        %v476 = vlaneseq
        %v477 = vshrl.u32 %v476, 7
        %v478 = vsub.s32 0, %v477
        %v479 = vrot.slane %v304, %v478
        %v480 = vlaneseq
        %v481 = vshrl.u32 %v480, 7
        %v482 = vsub.s32 1, %v481
        %v483 = vrot.slane %v304, %v482
        %v486 = vmul.f32 %v474, %v479
        %v487 = vmul.f32 %v473, %v483
        %488 = vst [vmem:[#allocation2 + $0x10] sm:$0xff] %v486
        %489 = vst [vmem:[#allocation2 + $0x18] sm:$0xff] %v487
        %490 = vrot.lane.b32.xlu0 %v442, 15
        %v491 = vpop.permute.xlu0 %490
        %492 = vrot.lane.b32.xlu0 %v443, 15
        %v493 = vpop.permute.xlu0 %492
        %vm494 = vcmp.lt.s32.totalorder %v449, 15
        %v495 = vsel %vm494, %v491, %v493
        %v496 = vsel %vm494, %v493, %v491
        %v498 = vlaneseq
        %v499 = vshrl.u32 %v498, 7
        %v500 = vsub.s32 0, %v499
        %v501 = vrot.slane %v306, %v500
        %v502 = vlaneseq
        %v503 = vshrl.u32 %v502, 7
        %v504 = vsub.s32 1, %v503
        %v505 = vrot.slane %v306, %v504
        %v508 = vmul.f32 %v496, %v501
        %v509 = vmul.f32 %v495, %v505
        %510 = vst [vmem:[#allocation2 + $0x20] sm:$0xff] %v508
        %511 = vst [vmem:[#allocation2 + $0x28] sm:$0xff] %v509
        %512 = vrot.lane.b32.xlu0 %v442, 1
        %v513 = vpop.permute.xlu0 %512
        %514 = vrot.lane.b32.xlu0 %v443, 1
        %v515 = vpop.permute.xlu0 %514
        %vm516 = vcmp.lt.s32.totalorder %v449, 1
        %v517 = vsel %vm516, %v513, %v515
        %v518 = vsel %vm516, %v515, %v513
        %v520 = vlaneseq
        %v521 = vshrl.u32 %v520, 7
        %v522 = vsub.s32 0, %v521
        %v523 = vrot.slane %v308, %v522
        %v524 = vlaneseq
        %v525 = vshrl.u32 %v524, 7
        %v526 = vsub.s32 1, %v525
        %v527 = vrot.slane %v308, %v526
        %v530 = vmul.f32 %v518, %v523
        %v531 = vmul.f32 %v517, %v527
        %532 = vst [vmem:[#allocation2 + $0x30] sm:$0xff] %v530
        %533 = vst [vmem:[#allocation2 + $0x38] sm:$0xff] %v531
        %v535 = vlaneseq
        %v536 = vshrl.u32 %v535, 7
        %v537 = vsub.s32 0, %v536
        %v538 = vrot.slane %v310, %v537
        %v539 = vlaneseq
        %v540 = vshrl.u32 %v539, 7
        %v541 = vsub.s32 1, %v540
        %v542 = vrot.slane %v310, %v541
        %v545 = vmul.f32 %v442, %v538
        %v546 = vmul.f32 %v443, %v542
        %547 = vst [vmem:[#allocation2 + $0x40] sm:$0xff] %v545
        %548 = vst [vmem:[#allocation2 + $0x48] sm:$0xff] %v546
        %549 = vrot.lane.b32.xlu0 %v442, 127
        %v550 = vpop.permute.xlu0 %549
        %551 = vrot.lane.b32.xlu0 %v443, 127
        %v552 = vpop.permute.xlu0 %551
        %vm553 = vcmp.lt.s32.totalorder %v449, 127
        %v554 = vsel %vm553, %v550, %v552
        %v555 = vsel %vm553, %v552, %v550
        %v557 = vlaneseq
        %v558 = vshrl.u32 %v557, 7
        %v559 = vsub.s32 0, %v558
        %v560 = vrot.slane %v312, %v559
        %v561 = vlaneseq
        %v562 = vshrl.u32 %v561, 7
        %v563 = vsub.s32 1, %v562
        %v564 = vrot.slane %v312, %v563
        %v567 = vmul.f32 %v554, %v560
        %v568 = vmul.f32 %v555, %v564
        %569 = vst [vmem:[#allocation2 + $0x50] sm:$0xff] %v567
        %570 = vst [vmem:[#allocation2 + $0x58] sm:$0xff] %v568
        %571 = vrot.lane.b32.xlu0 %v442, 113
        %v572 = vpop.permute.xlu0 %571
        %573 = vrot.lane.b32.xlu0 %v443, 113
        %v574 = vpop.permute.xlu0 %573
        %vm575 = vcmp.lt.s32.totalorder %v449, 113
        %v576 = vsel %vm575, %v572, %v574
        %v577 = vsel %vm575, %v574, %v572
        %v579 = vlaneseq
        %v580 = vshrl.u32 %v579, 7
        %v581 = vsub.s32 0, %v580
        %v582 = vrot.slane %v314, %v581
        %v583 = vlaneseq
        %v584 = vshrl.u32 %v583, 7
        %v585 = vsub.s32 1, %v584
        %v586 = vrot.slane %v314, %v585
        %v589 = vmul.f32 %v576, %v582
        %v590 = vmul.f32 %v577, %v586
        %591 = vst [vmem:[#allocation2 + $0x60] sm:$0xff] %v589
        %592 = vst [vmem:[#allocation2 + $0x68] sm:$0xff] %v590
        %593 = vrot.lane.b32.xlu0 %v442, 112
        %v594 = vpop.permute.xlu0 %593
        %595 = vrot.lane.b32.xlu0 %v443, 112
        %v596 = vpop.permute.xlu0 %595
        %vm597 = vcmp.lt.s32.totalorder %v449, 112
        %v598 = vsel %vm597, %v594, %v596
        %v599 = vsel %vm597, %v596, %v594
        %v601 = vlaneseq
        %v602 = vshrl.u32 %v601, 7
        %v603 = vsub.s32 0, %v602
        %v604 = vrot.slane %v316, %v603
        %v605 = vlaneseq
        %v606 = vshrl.u32 %v605, 7
        %v607 = vsub.s32 1, %v606
        %v608 = vrot.slane %v316, %v607
        %v611 = vmul.f32 %v598, %v604
        %v612 = vmul.f32 %v599, %v608
        %613 = vst [vmem:[#allocation2 + $0x70] sm:$0xff] %v611
        %614 = vst [vmem:[#allocation2 + $0x78] sm:$0xff] %v612
        %615 = vrot.lane.b32.xlu0 %v442, 111
        %v616 = vpop.permute.xlu0 %615
        %617 = vrot.lane.b32.xlu0 %v443, 111
        %v618 = vpop.permute.xlu0 %617
        %vm619 = vcmp.lt.s32.totalorder %v449, 111
        %v620 = vsel %vm619, %v616, %v618
        %v621 = vsel %vm619, %v618, %v616
        %v623 = vlaneseq
        %v624 = vshrl.u32 %v623, 7
        %v625 = vsub.s32 0, %v624
        %v626 = vrot.slane %v318, %v625
        %v627 = vlaneseq
        %v628 = vshrl.u32 %v627, 7
        %v629 = vsub.s32 1, %v628
        %v630 = vrot.slane %v318, %v629
        %v633 = vmul.f32 %v620, %v626
        %v634 = vmul.f32 %v621, %v630
        %635 = vst [vmem:[#allocation2 + $0x80] sm:$0xff] %v633
        %636 = vst [vmem:[#allocation2 + $0x88] sm:$0xff] %v634
        %v637 = vld [vmem:[#allocation2] sm:$0xff]
        %v638 = vld [vmem:[#allocation2 + $0x8] sm:$0xff]
        %v639 = vld [vmem:[#allocation2 + $0x10] sm:$0xff]
        %v640 = vld [vmem:[#allocation2 + $0x18] sm:$0xff]
        %v641 = vld [vmem:[#allocation2 + $0x20] sm:$0xff]
        %v642 = vld [vmem:[#allocation2 + $0x28] sm:$0xff]
        %v643 = vld [vmem:[#allocation2 + $0x30] sm:$0xff]
        %v644 = vld [vmem:[#allocation2 + $0x38] sm:$0xff]
        %v645 = vld [vmem:[#allocation2 + $0x40] sm:$0xff]
        %v646 = vld [vmem:[#allocation2 + $0x48] sm:$0xff]
        %v647 = vld [vmem:[#allocation2 + $0x50] sm:$0xff]
        %v648 = vld [vmem:[#allocation2 + $0x58] sm:$0xff]
        %v649 = vld [vmem:[#allocation2 + $0x60] sm:$0xff]
        %v650 = vld [vmem:[#allocation2 + $0x68] sm:$0xff]
        %v651 = vld [vmem:[#allocation2 + $0x70] sm:$0xff]
        %v652 = vld [vmem:[#allocation2 + $0x78] sm:$0xff]
        %v653 = vld [vmem:[#allocation2 + $0x80] sm:$0xff]
        %v654 = vld [vmem:[#allocation2 + $0x88] sm:$0xff]
        %vm655 = vcmask 588800
        %v657 = vsel %vm655, %v325, 0
        %659 = vmatprep.subr.mxu0 %v638
        %660 = vmatpush1.msra.mxu0 %v637
        %661 = vmatprep.subr.mxu0 %v640
        %662 = vmatpush1.msra.mxu0 %v639
        %663 = vmatprep.subr.mxu0 %v642
        %664 = vmatpush1.msra.mxu0 %v641
        %665 = vmatprep.subr.mxu0 %v644
        %666 = vmatpush1.msra.mxu0 %v643
        %667 = vmatprep.subr.mxu0 %v646
        %668 = vmatpush1.msra.mxu0 %v645
        %669 = vmatprep.subr.mxu0 %v648
        %670 = vmatpush1.msra.mxu0 %v647
        %671 = vmatprep.subr.mxu0 %v650
        %672 = vmatpush1.msra.mxu0 %v649
        %673 = vmatprep.subr.mxu0 %v652
        %674 = vmatpush1.msra.mxu0 %v651
        %675 = vmatprep.subr.mxu0 %v654
        %676 = vmatpush1.msra.mxu0 %v653
        %677 = vmatprep.subr.mxu0 0.0
        %678 = vmatpush1.msra.mxu0 0.0
        %679 = vmatprep.subr.mxu0 0.0
        %680 = vmatpush1.msra.mxu0 0.0
        %681 = vmatprep.subr.mxu0 0.0
        %682 = vmatpush1.msra.mxu0 0.0
        %683 = vmatprep.subr.mxu0 0.0
        %684 = vmatpush1.msra.mxu0 0.0
        %685 = vmatprep.subr.mxu0 0.0
        %686 = vmatpush1.msra.mxu0 0.0
        %687 = vmatprep.subr.mxu0 0.0
        %688 = vmatpush1.msra.mxu0 0.0
        %689 = vmatprep.subr.mxu0 0.0
        %690 = vmatpush1.msra.mxu0 0.0
        %691 = vmatprep.subr.mxu0 0.0
        %692 = vmatpush1.msra.mxu0 0.0
        %693 = vmatprep.subr.mxu0 0.0
        %694 = vmatpush1.msra.mxu0 0.0
        %695 = vmatprep.subr.mxu0 0.0
        %696 = vmatpush1.msra.mxu0 0.0
        %697 = vmatprep.subr.mxu0 0.0
        %698 = vmatpush1.msra.mxu0 0.0
        %699 = vmatprep.subr.mxu0 0.0
        %700 = vmatpush1.msra.mxu0 0.0
        %701 = vmatprep.subr.mxu0 0.0
        %702 = vmatpush1.msra.mxu0 0.0
        %703 = vmatprep.subr.mxu0 0.0
        %704 = vmatpush1.msra.mxu0 0.0
        %705 = vmatprep.subr.mxu0 0.0
        %706 = vmatpush1.msra.mxu0 0.0
        %707 = vmatprep.subr.mxu0 0.0
        %708 = vmatpush1.msra.mxu0 0.0
        %709 = vmatprep.subr.mxu0 0.0
        %710 = vmatpush1.msra.mxu0 0.0
        %711 = vmatprep.subr.mxu0 0.0
        %712 = vmatpush1.msra.mxu0 0.0
        %713 = vmatprep.subr.mxu0 0.0
        %714 = vmatpush1.msra.mxu0 0.0
        %715 = vmatprep.subr.mxu0 0.0
        %716 = vmatpush1.msra.mxu0 0.0
        %717 = vmatprep.subr.mxu0 0.0
        %718 = vmatpush1.msra.mxu0 0.0
        %719 = vmatprep.subr.mxu0 0.0
        %720 = vmatpush1.msra.mxu0 0.0
        %721 = vmatprep.subr.mxu0 0.0
        %722 = vmatpush1.msra.mxu0 0.0
        %723 = vmatprep.mubr.f32.mxu0 0.0
        %724 = vmatmul.mubr.f32.gmra.mrb[0].mxu0 %v657
        %v725 = vpop.f32.mrb[0].mxu0
        %v726 = vadd.f32 0.0, %v725
        %v727 = vpop.f32.mrb[0].mxu0
        %v728 = vadd.f32 0.0, %v727
        %729 = vdwg.mxu0
        %v732 = vrot.slane %v726, 4
        %v733 = vrot.slane %v728, 4
        %736 = vst [vmem:[%s290] sm:$0xf0] %v732
        %737 = vst [vmem:[%s290 + $0x8] sm:$0xf0] %v733
        %v738 = vld [vmem:[%s1 + $0x28] sm:$0xff]
        %v739 = vld [vmem:[%s1 + $0x30] sm:$0xff]
        %v740 = vld [vmem:[%s1 + $0x38] sm:$0xff]
        %v741 = vld [vmem:[%s1 + $0x40] sm:$0xff]
        %v742 = vld [vmem:[%s1 + $0x48] sm:$0xff]
        %v743 = vld [vmem:[%s2 + $0x8] sm:$0xff]
        %v744 = vld [vmem:[%s3 + $0x4] sm:$0xf]
        %v745 = vld [vmem:[%s290] sm:$0xff]
        %v746 = vld [vmem:[%s290 + $0x8] sm:$0xff]
        %v747 = vld [vmem:[%s290 + $0x10] sm:$0xff]
        %v748 = vld [vmem:[%s290 + $0x18] sm:$0xff]
        %750 = vset.pattern.permute.xlu0 0
        %751 = vperm.xlu0 %750, %v738
        %v752 = vpop.permute.xlu0 %751
        %755 = vset.pattern.permute.xlu0 0
        %756 = vperm.xlu0 %755, %v739
        %v757 = vpop.permute.xlu0 %756
        %v759 = vmul.f32 %v745, %v752
        %v760 = vmul.f32 %v746, %v752
        %v761 = vmul.f32 %v747, %v757
        %v762 = vmul.f32 %v748, %v757
        %764 = vset.pattern.permute.xlu0 0
        %765 = vperm.xlu0 %764, %v740
        %v766 = vpop.permute.xlu0 %765
        %769 = vset.pattern.permute.xlu0 0
        %770 = vperm.xlu0 %769, %v741
        %v771 = vpop.permute.xlu0 %770
        %v773 = vadd.f32 %v759, %v766
        %v774 = vadd.f32 %v760, %v766
        %v775 = vadd.f32 %v761, %v771
        %v776 = vadd.f32 %v762, %v771
        %v777 = vmax.f32 %v773, 0.0
        %v778 = vmax.f32 %v774, 0.0
        %v779 = vmax.f32 %v775, 0.0
        %v780 = vmax.f32 %v776, 0.0
        %782 = vset.pattern.permute.xlu0 0
        %783 = vperm.xlu0 %782, %v742
        %v784 = vpop.permute.xlu0 %783
        %v787 = vsel %vm367, %v743, 0
        %789 = vmatprep.subr.mxu0 %v778
        %790 = vmatpush1.msra.mxu0 %v777
        %791 = vmatprep.subr.mxu0 %v780
        %792 = vmatpush1.msra.mxu0 %v779
        %793 = vmatprep.subr.mxu0 0.0
        %794 = vmatpush1.msra.mxu0 0.0
        %795 = vmatprep.subr.mxu0 0.0
        %796 = vmatpush1.msra.mxu0 0.0
        %797 = vmatprep.subr.mxu0 0.0
        %798 = vmatpush1.msra.mxu0 0.0
        %799 = vmatprep.subr.mxu0 0.0
        %800 = vmatpush1.msra.mxu0 0.0
        %801 = vmatprep.subr.mxu0 0.0
        %802 = vmatpush1.msra.mxu0 0.0
        %803 = vmatprep.subr.mxu0 0.0
        %804 = vmatpush1.msra.mxu0 0.0
        %805 = vmatprep.subr.mxu0 0.0
        %806 = vmatpush1.msra.mxu0 0.0
        %807 = vmatprep.subr.mxu0 0.0
        %808 = vmatpush1.msra.mxu0 0.0
        %809 = vmatprep.subr.mxu0 0.0
        %810 = vmatpush1.msra.mxu0 0.0
        %811 = vmatprep.subr.mxu0 0.0
        %812 = vmatpush1.msra.mxu0 0.0
        %813 = vmatprep.subr.mxu0 0.0
        %814 = vmatpush1.msra.mxu0 0.0
        %815 = vmatprep.subr.mxu0 0.0
        %816 = vmatpush1.msra.mxu0 0.0
        %817 = vmatprep.subr.mxu0 0.0
        %818 = vmatpush1.msra.mxu0 0.0
        %819 = vmatprep.subr.mxu0 0.0
        %820 = vmatpush1.msra.mxu0 0.0
        %821 = vmatprep.subr.mxu0 0.0
        %822 = vmatpush1.msra.mxu0 0.0
        %823 = vmatprep.subr.mxu0 0.0
        %824 = vmatpush1.msra.mxu0 0.0
        %825 = vmatprep.subr.mxu0 0.0
        %826 = vmatpush1.msra.mxu0 0.0
        %827 = vmatprep.subr.mxu0 0.0
        %828 = vmatpush1.msra.mxu0 0.0
        %829 = vmatprep.subr.mxu0 0.0
        %830 = vmatpush1.msra.mxu0 0.0
        %831 = vmatprep.subr.mxu0 0.0
        %832 = vmatpush1.msra.mxu0 0.0
        %833 = vmatprep.subr.mxu0 0.0
        %834 = vmatpush1.msra.mxu0 0.0
        %835 = vmatprep.subr.mxu0 0.0
        %836 = vmatpush1.msra.mxu0 0.0
        %837 = vmatprep.subr.mxu0 0.0
        %838 = vmatpush1.msra.mxu0 0.0
        %839 = vmatprep.subr.mxu0 0.0
        %840 = vmatpush1.msra.mxu0 0.0
        %841 = vmatprep.subr.mxu0 0.0
        %842 = vmatpush1.msra.mxu0 0.0
        %843 = vmatprep.subr.mxu0 0.0
        %844 = vmatpush1.msra.mxu0 0.0
        %845 = vmatprep.subr.mxu0 0.0
        %846 = vmatpush1.msra.mxu0 0.0
        %847 = vmatprep.subr.mxu0 0.0
        %848 = vmatpush1.msra.mxu0 0.0
        %849 = vmatprep.subr.mxu0 0.0
        %850 = vmatpush1.msra.mxu0 0.0
        %851 = vmatprep.subr.mxu0 0.0
        %852 = vmatpush1.msra.mxu0 0.0
        %853 = vmatprep.mubr.f32.mxu0 0.0
        %854 = vmatmul.mubr.f32.gmra.mrb[0].mxu0 %v787
        %v855 = vpop.f32.mrb[0].mxu0
        %v856 = vadd.f32 %v784, %v855
        %v857 = vpop.f32.mrb[0].mxu0
        %v858 = vadd.f32 %v784, %v857
        %859 = vdwg.mxu0
        %v860 = vmax.f32 %v856, 0.0
        %v861 = vmax.f32 %v858, 0.0
        %862 = vrot.lane.b32.xlu0 %v860, 17
        %v863 = vpop.permute.xlu0 %862
        %864 = vrot.lane.b32.xlu0 %v861, 17
        %v865 = vpop.permute.xlu0 %864
        %v866 = vsel %vm450, %v863, %v865
        %v867 = vsel %vm450, %v865, %v863
        %v868 = vmul.f32 %v867, %v457
        %v869 = vmul.f32 %v866, %v461
        %870 = vst [vmem:[#allocation2] sm:$0xff] %v868
        %871 = vst [vmem:[#allocation2 + $0x8] sm:$0xff] %v869
        %872 = vrot.lane.b32.xlu0 %v860, 16
        %v873 = vpop.permute.xlu0 %872
        %874 = vrot.lane.b32.xlu0 %v861, 16
        %v875 = vpop.permute.xlu0 %874
        %v876 = vsel %vm472, %v873, %v875
        %v877 = vsel %vm472, %v875, %v873
        %v878 = vmul.f32 %v877, %v479
        %v879 = vmul.f32 %v876, %v483
        %880 = vst [vmem:[#allocation2 + $0x10] sm:$0xff] %v878
        %881 = vst [vmem:[#allocation2 + $0x18] sm:$0xff] %v879
        %882 = vrot.lane.b32.xlu0 %v860, 15
        %v883 = vpop.permute.xlu0 %882
        %884 = vrot.lane.b32.xlu0 %v861, 15
        %v885 = vpop.permute.xlu0 %884
        %v886 = vsel %vm494, %v883, %v885
        %v887 = vsel %vm494, %v885, %v883
        %v888 = vmul.f32 %v887, %v501
        %v889 = vmul.f32 %v886, %v505
        %890 = vst [vmem:[#allocation2 + $0x20] sm:$0xff] %v888
        %891 = vst [vmem:[#allocation2 + $0x28] sm:$0xff] %v889
        %892 = vrot.lane.b32.xlu0 %v860, 1
        %v893 = vpop.permute.xlu0 %892
        %894 = vrot.lane.b32.xlu0 %v861, 1
        %v895 = vpop.permute.xlu0 %894
        %v896 = vsel %vm516, %v893, %v895
        %v897 = vsel %vm516, %v895, %v893
        %v898 = vmul.f32 %v897, %v523
        %v899 = vmul.f32 %v896, %v527
        %900 = vst [vmem:[#allocation2 + $0x30] sm:$0xff] %v898
        %901 = vst [vmem:[#allocation2 + $0x38] sm:$0xff] %v899
        %v902 = vmul.f32 %v860, %v538
        %v903 = vmul.f32 %v861, %v542
        %904 = vst [vmem:[#allocation2 + $0x40] sm:$0xff] %v902
        %905 = vst [vmem:[#allocation2 + $0x48] sm:$0xff] %v903
        %906 = vrot.lane.b32.xlu0 %v860, 127
        %v907 = vpop.permute.xlu0 %906
        %908 = vrot.lane.b32.xlu0 %v861, 127
        %v909 = vpop.permute.xlu0 %908
        %v910 = vsel %vm553, %v907, %v909
        %v911 = vsel %vm553, %v909, %v907
        %v912 = vmul.f32 %v910, %v560
        %v913 = vmul.f32 %v911, %v564
        %914 = vst [vmem:[#allocation2 + $0x50] sm:$0xff] %v912
        %915 = vst [vmem:[#allocation2 + $0x58] sm:$0xff] %v913
        %916 = vrot.lane.b32.xlu0 %v860, 113
        %v917 = vpop.permute.xlu0 %916
        %918 = vrot.lane.b32.xlu0 %v861, 113
        %v919 = vpop.permute.xlu0 %918
        %v920 = vsel %vm575, %v917, %v919
        %v921 = vsel %vm575, %v919, %v917
        %v922 = vmul.f32 %v920, %v582
        %v923 = vmul.f32 %v921, %v586
        %924 = vst [vmem:[#allocation2 + $0x60] sm:$0xff] %v922
        %925 = vst [vmem:[#allocation2 + $0x68] sm:$0xff] %v923
        %926 = vrot.lane.b32.xlu0 %v860, 112
        %v927 = vpop.permute.xlu0 %926
        %928 = vrot.lane.b32.xlu0 %v861, 112
        %v929 = vpop.permute.xlu0 %928
        %v930 = vsel %vm597, %v927, %v929
        %v931 = vsel %vm597, %v929, %v927
        %v932 = vmul.f32 %v930, %v604
        %v933 = vmul.f32 %v931, %v608
        %934 = vst [vmem:[#allocation2 + $0x70] sm:$0xff] %v932
        %935 = vst [vmem:[#allocation2 + $0x78] sm:$0xff] %v933
        %936 = vrot.lane.b32.xlu0 %v860, 111
        %v937 = vpop.permute.xlu0 %936
        %938 = vrot.lane.b32.xlu0 %v861, 111
        %v939 = vpop.permute.xlu0 %938
        %v940 = vsel %vm619, %v937, %v939
        %v941 = vsel %vm619, %v939, %v937
        %v942 = vmul.f32 %v940, %v626
        %v943 = vmul.f32 %v941, %v630
        %944 = vst [vmem:[#allocation2 + $0x80] sm:$0xff] %v942
        %945 = vst [vmem:[#allocation2 + $0x88] sm:$0xff] %v943
        %v946 = vld [vmem:[#allocation2] sm:$0xff]
        %v947 = vld [vmem:[#allocation2 + $0x8] sm:$0xff]
        %v948 = vld [vmem:[#allocation2 + $0x10] sm:$0xff]
        %v949 = vld [vmem:[#allocation2 + $0x18] sm:$0xff]
        %v950 = vld [vmem:[#allocation2 + $0x20] sm:$0xff]
        %v951 = vld [vmem:[#allocation2 + $0x28] sm:$0xff]
        %v952 = vld [vmem:[#allocation2 + $0x30] sm:$0xff]
        %v953 = vld [vmem:[#allocation2 + $0x38] sm:$0xff]
        %v954 = vld [vmem:[#allocation2 + $0x40] sm:$0xff]
        %v955 = vld [vmem:[#allocation2 + $0x48] sm:$0xff]
        %v956 = vld [vmem:[#allocation2 + $0x50] sm:$0xff]
        %v957 = vld [vmem:[#allocation2 + $0x58] sm:$0xff]
        %v958 = vld [vmem:[#allocation2 + $0x60] sm:$0xff]
        %v959 = vld [vmem:[#allocation2 + $0x68] sm:$0xff]
        %v960 = vld [vmem:[#allocation2 + $0x70] sm:$0xff]
        %v961 = vld [vmem:[#allocation2 + $0x78] sm:$0xff]
        %v962 = vld [vmem:[#allocation2 + $0x80] sm:$0xff]
        %v963 = vld [vmem:[#allocation2 + $0x88] sm:$0xff]
        %v965 = vsel %vm655, %v744, 0
        %967 = vmatprep.subr.mxu0 %v947
        %968 = vmatpush1.msra.mxu0 %v946
        %969 = vmatprep.subr.mxu0 %v949
        %970 = vmatpush1.msra.mxu0 %v948
        %971 = vmatprep.subr.mxu0 %v951
        %972 = vmatpush1.msra.mxu0 %v950
        %973 = vmatprep.subr.mxu0 %v953
        %974 = vmatpush1.msra.mxu0 %v952
        %975 = vmatprep.subr.mxu0 %v955
        %976 = vmatpush1.msra.mxu0 %v954
        %977 = vmatprep.subr.mxu0 %v957
        %978 = vmatpush1.msra.mxu0 %v956
        %979 = vmatprep.subr.mxu0 %v959
        %980 = vmatpush1.msra.mxu0 %v958
        %981 = vmatprep.subr.mxu0 %v961
        %982 = vmatpush1.msra.mxu0 %v960
        %983 = vmatprep.subr.mxu0 %v963
        %984 = vmatpush1.msra.mxu0 %v962
        %985 = vmatprep.subr.mxu0 0.0
        %986 = vmatpush1.msra.mxu0 0.0
        %987 = vmatprep.subr.mxu0 0.0
        %988 = vmatpush1.msra.mxu0 0.0
        %989 = vmatprep.subr.mxu0 0.0
        %990 = vmatpush1.msra.mxu0 0.0
        %991 = vmatprep.subr.mxu0 0.0
        %992 = vmatpush1.msra.mxu0 0.0
        %993 = vmatprep.subr.mxu0 0.0
        %994 = vmatpush1.msra.mxu0 0.0
        %995 = vmatprep.subr.mxu0 0.0
        %996 = vmatpush1.msra.mxu0 0.0
        %997 = vmatprep.subr.mxu0 0.0
        %998 = vmatpush1.msra.mxu0 0.0
        %999 = vmatprep.subr.mxu0 0.0
        %1000 = vmatpush1.msra.mxu0 0.0
        %1001 = vmatprep.subr.mxu0 0.0
        %1002 = vmatpush1.msra.mxu0 0.0
        %1003 = vmatprep.subr.mxu0 0.0
        %1004 = vmatpush1.msra.mxu0 0.0
        %1005 = vmatprep.subr.mxu0 0.0
        %1006 = vmatpush1.msra.mxu0 0.0
        %1007 = vmatprep.subr.mxu0 0.0
        %1008 = vmatpush1.msra.mxu0 0.0
        %1009 = vmatprep.subr.mxu0 0.0
        %1010 = vmatpush1.msra.mxu0 0.0
        %1011 = vmatprep.subr.mxu0 0.0
        %1012 = vmatpush1.msra.mxu0 0.0
        %1013 = vmatprep.subr.mxu0 0.0
        %1014 = vmatpush1.msra.mxu0 0.0
        %1015 = vmatprep.subr.mxu0 0.0
        %1016 = vmatpush1.msra.mxu0 0.0
        %1017 = vmatprep.subr.mxu0 0.0
        %1018 = vmatpush1.msra.mxu0 0.0
        %1019 = vmatprep.subr.mxu0 0.0
        %1020 = vmatpush1.msra.mxu0 0.0
        %1021 = vmatprep.subr.mxu0 0.0
        %1022 = vmatpush1.msra.mxu0 0.0
        %1023 = vmatprep.subr.mxu0 0.0
        %1024 = vmatpush1.msra.mxu0 0.0
        %1025 = vmatprep.subr.mxu0 0.0
        %1026 = vmatpush1.msra.mxu0 0.0
        %1027 = vmatprep.subr.mxu0 0.0
        %1028 = vmatpush1.msra.mxu0 0.0
        %1029 = vmatprep.subr.mxu0 0.0
        %1030 = vmatpush1.msra.mxu0 0.0
        %1031 = vmatprep.mubr.f32.mxu0 0.0
        %1032 = vmatmul.mubr.f32.gmra.mrb[0].mxu0 %v965
        %v1033 = vpop.f32.mrb[0].mxu0
        %v1034 = vadd.f32 0.0, %v1033
        %v1035 = vpop.f32.mrb[0].mxu0
        %v1036 = vadd.f32 0.0, %v1035
        %1037 = vdwg.mxu0
        %1038 = vst [vmem:[%s290 + $0x10] sm:$0xf] %v1034
        %1039 = vst [vmem:[%s290 + $0x18] sm:$0xf] %v1036
        %v1040 = vld [vmem:[%s1 + $0x50] sm:$0xff]
        %v1041 = vld [vmem:[%s1 + $0x58] sm:$0xff]
        %v1042 = vld [vmem:[%s1 + $0x60] sm:$0xff]
        %v1043 = vld [vmem:[%s1 + $0x68] sm:$0xff]
        %v1044 = vld [vmem:[%s1 + $0x70] sm:$0xff]
        %v1045 = vld [vmem:[%s2 + $0x10] sm:$0xff]
        %v1046 = vld [vmem:[%s3 + $0x8] sm:$0xf]
        %v1047 = vld [vmem:[%s290] sm:$0xff]
        %v1048 = vld [vmem:[%s290 + $0x8] sm:$0xff]
        %v1049 = vld [vmem:[%s290 + $0x10] sm:$0xff]
        %v1050 = vld [vmem:[%s290 + $0x18] sm:$0xff]
        %1052 = vset.pattern.permute.xlu0 0
        %1053 = vperm.xlu0 %1052, %v1040
        %v1054 = vpop.permute.xlu0 %1053
        %1057 = vset.pattern.permute.xlu0 0
        %1058 = vperm.xlu0 %1057, %v1041
        %v1059 = vpop.permute.xlu0 %1058
        %v1061 = vmul.f32 %v1047, %v1054
        %v1062 = vmul.f32 %v1048, %v1054
        %v1063 = vmul.f32 %v1049, %v1059
        %v1064 = vmul.f32 %v1050, %v1059
        %1066 = vset.pattern.permute.xlu0 0
        %1067 = vperm.xlu0 %1066, %v1042
        %v1068 = vpop.permute.xlu0 %1067
        %1071 = vset.pattern.permute.xlu0 0
        %1072 = vperm.xlu0 %1071, %v1043
        %v1073 = vpop.permute.xlu0 %1072
        %v1075 = vadd.f32 %v1061, %v1068
        %v1076 = vadd.f32 %v1062, %v1068
        %v1077 = vadd.f32 %v1063, %v1073
        %v1078 = vadd.f32 %v1064, %v1073
        %v1079 = vmax.f32 %v1075, 0.0
        %v1080 = vmax.f32 %v1076, 0.0
        %v1081 = vmax.f32 %v1077, 0.0
        %v1082 = vmax.f32 %v1078, 0.0
        %1084 = vset.pattern.permute.xlu0 0
        %1085 = vperm.xlu0 %1084, %v1044
        %v1086 = vpop.permute.xlu0 %1085
        %v1089 = vsel %vm367, %v1045, 0
        %1091 = vmatprep.subr.mxu0 %v1080
        %1092 = vmatpush1.msra.mxu0 %v1079
        %1093 = vmatprep.subr.mxu0 %v1082
        %1094 = vmatpush1.msra.mxu0 %v1081
        %1095 = vmatprep.subr.mxu0 0.0
        %1096 = vmatpush1.msra.mxu0 0.0
        %1097 = vmatprep.subr.mxu0 0.0
        %1098 = vmatpush1.msra.mxu0 0.0
        %1099 = vmatprep.subr.mxu0 0.0
        %1100 = vmatpush1.msra.mxu0 0.0
        %1101 = vmatprep.subr.mxu0 0.0
        %1102 = vmatpush1.msra.mxu0 0.0
        %1103 = vmatprep.subr.mxu0 0.0
        %1104 = vmatpush1.msra.mxu0 0.0
        %1105 = vmatprep.subr.mxu0 0.0
        %1106 = vmatpush1.msra.mxu0 0.0
        %1107 = vmatprep.subr.mxu0 0.0
        %1108 = vmatpush1.msra.mxu0 0.0
        %1109 = vmatprep.subr.mxu0 0.0
        %1110 = vmatpush1.msra.mxu0 0.0
        %1111 = vmatprep.subr.mxu0 0.0
        %1112 = vmatpush1.msra.mxu0 0.0
        %1113 = vmatprep.subr.mxu0 0.0
        %1114 = vmatpush1.msra.mxu0 0.0
        %1115 = vmatprep.subr.mxu0 0.0
        %1116 = vmatpush1.msra.mxu0 0.0
        %1117 = vmatprep.subr.mxu0 0.0
        %1118 = vmatpush1.msra.mxu0 0.0
        %1119 = vmatprep.subr.mxu0 0.0
        %1120 = vmatpush1.msra.mxu0 0.0
        %1121 = vmatprep.subr.mxu0 0.0
        %1122 = vmatpush1.msra.mxu0 0.0
        %1123 = vmatprep.subr.mxu0 0.0
        %1124 = vmatpush1.msra.mxu0 0.0
        %1125 = vmatprep.subr.mxu0 0.0
        %1126 = vmatpush1.msra.mxu0 0.0
        %1127 = vmatprep.subr.mxu0 0.0
        %1128 = vmatpush1.msra.mxu0 0.0
        %1129 = vmatprep.subr.mxu0 0.0
        %1130 = vmatpush1.msra.mxu0 0.0
        %1131 = vmatprep.subr.mxu0 0.0
        %1132 = vmatpush1.msra.mxu0 0.0
        %1133 = vmatprep.subr.mxu0 0.0
        %1134 = vmatpush1.msra.mxu0 0.0
        %1135 = vmatprep.subr.mxu0 0.0
        %1136 = vmatpush1.msra.mxu0 0.0
        %1137 = vmatprep.subr.mxu0 0.0
        %1138 = vmatpush1.msra.mxu0 0.0
        %1139 = vmatprep.subr.mxu0 0.0
        %1140 = vmatpush1.msra.mxu0 0.0
        %1141 = vmatprep.subr.mxu0 0.0
        %1142 = vmatpush1.msra.mxu0 0.0
        %1143 = vmatprep.subr.mxu0 0.0
        %1144 = vmatpush1.msra.mxu0 0.0
        %1145 = vmatprep.subr.mxu0 0.0
        %1146 = vmatpush1.msra.mxu0 0.0
        %1147 = vmatprep.subr.mxu0 0.0
        %1148 = vmatpush1.msra.mxu0 0.0
        %1149 = vmatprep.subr.mxu0 0.0
        %1150 = vmatpush1.msra.mxu0 0.0
        %1151 = vmatprep.subr.mxu0 0.0
        %1152 = vmatpush1.msra.mxu0 0.0
        %1153 = vmatprep.subr.mxu0 0.0
        %1154 = vmatpush1.msra.mxu0 0.0
        %1155 = vmatprep.mubr.f32.mxu0 0.0
        %1156 = vmatmul.mubr.f32.gmra.mrb[0].mxu0 %v1089
        %v1157 = vpop.f32.mrb[0].mxu0
        %v1158 = vadd.f32 %v1086, %v1157
        %v1159 = vpop.f32.mrb[0].mxu0
        %v1160 = vadd.f32 %v1086, %v1159
        %1161 = vdwg.mxu0
        %v1162 = vmax.f32 %v1158, 0.0
        %v1163 = vmax.f32 %v1160, 0.0
        %1164 = vrot.lane.b32.xlu0 %v1162, 17
        %v1165 = vpop.permute.xlu0 %1164
        %1166 = vrot.lane.b32.xlu0 %v1163, 17
        %v1167 = vpop.permute.xlu0 %1166
        %v1168 = vsel %vm450, %v1165, %v1167
        %v1169 = vsel %vm450, %v1167, %v1165
        %v1170 = vmul.f32 %v1169, %v457
        %v1171 = vmul.f32 %v1168, %v461
        %1172 = vst [vmem:[#allocation2] sm:$0xff] %v1170
        %1173 = vst [vmem:[#allocation2 + $0x8] sm:$0xff] %v1171
        %1174 = vrot.lane.b32.xlu0 %v1162, 16
        %v1175 = vpop.permute.xlu0 %1174
        %1176 = vrot.lane.b32.xlu0 %v1163, 16
        %v1177 = vpop.permute.xlu0 %1176
        %v1178 = vsel %vm472, %v1175, %v1177
        %v1179 = vsel %vm472, %v1177, %v1175
        %v1180 = vmul.f32 %v1179, %v479
        %v1181 = vmul.f32 %v1178, %v483
        %1182 = vst [vmem:[#allocation2 + $0x10] sm:$0xff] %v1180
        %1183 = vst [vmem:[#allocation2 + $0x18] sm:$0xff] %v1181
        %1184 = vrot.lane.b32.xlu0 %v1162, 15
        %v1185 = vpop.permute.xlu0 %1184
        %1186 = vrot.lane.b32.xlu0 %v1163, 15
        %v1187 = vpop.permute.xlu0 %1186
        %v1188 = vsel %vm494, %v1185, %v1187
        %v1189 = vsel %vm494, %v1187, %v1185
        %v1190 = vmul.f32 %v1189, %v501
        %v1191 = vmul.f32 %v1188, %v505
        %1192 = vst [vmem:[#allocation2 + $0x20] sm:$0xff] %v1190
        %1193 = vst [vmem:[#allocation2 + $0x28] sm:$0xff] %v1191
        %1194 = vrot.lane.b32.xlu0 %v1162, 1
        %v1195 = vpop.permute.xlu0 %1194
        %1196 = vrot.lane.b32.xlu0 %v1163, 1
        %v1197 = vpop.permute.xlu0 %1196
        %v1198 = vsel %vm516, %v1195, %v1197
        %v1199 = vsel %vm516, %v1197, %v1195
        %v1200 = vmul.f32 %v1199, %v523
        %v1201 = vmul.f32 %v1198, %v527
        %1202 = vst [vmem:[#allocation2 + $0x30] sm:$0xff] %v1200
        %1203 = vst [vmem:[#allocation2 + $0x38] sm:$0xff] %v1201
        %v1204 = vmul.f32 %v1162, %v538
        %v1205 = vmul.f32 %v1163, %v542
        %1206 = vst [vmem:[#allocation2 + $0x40] sm:$0xff] %v1204
        %1207 = vst [vmem:[#allocation2 + $0x48] sm:$0xff] %v1205
        %1208 = vrot.lane.b32.xlu0 %v1162, 127
        %v1209 = vpop.permute.xlu0 %1208
        %1210 = vrot.lane.b32.xlu0 %v1163, 127
        %v1211 = vpop.permute.xlu0 %1210
        %v1212 = vsel %vm553, %v1209, %v1211
        %v1213 = vsel %vm553, %v1211, %v1209
        %v1214 = vmul.f32 %v1212, %v560
        %v1215 = vmul.f32 %v1213, %v564
        %1216 = vst [vmem:[#allocation2 + $0x50] sm:$0xff] %v1214
        %1217 = vst [vmem:[#allocation2 + $0x58] sm:$0xff] %v1215
        %1218 = vrot.lane.b32.xlu0 %v1162, 113
        %v1219 = vpop.permute.xlu0 %1218
        %1220 = vrot.lane.b32.xlu0 %v1163, 113
        %v1221 = vpop.permute.xlu0 %1220
        %v1222 = vsel %vm575, %v1219, %v1221
        %v1223 = vsel %vm575, %v1221, %v1219
        %v1224 = vmul.f32 %v1222, %v582
        %v1225 = vmul.f32 %v1223, %v586
        %1226 = vst [vmem:[#allocation2 + $0x60] sm:$0xff] %v1224
        %1227 = vst [vmem:[#allocation2 + $0x68] sm:$0xff] %v1225
        %1228 = vrot.lane.b32.xlu0 %v1162, 112
        %v1229 = vpop.permute.xlu0 %1228
        %1230 = vrot.lane.b32.xlu0 %v1163, 112
        %v1231 = vpop.permute.xlu0 %1230
        %v1232 = vsel %vm597, %v1229, %v1231
        %v1233 = vsel %vm597, %v1231, %v1229
        %v1234 = vmul.f32 %v1232, %v604
        %v1235 = vmul.f32 %v1233, %v608
        %1236 = vst [vmem:[#allocation2 + $0x70] sm:$0xff] %v1234
        %1237 = vst [vmem:[#allocation2 + $0x78] sm:$0xff] %v1235
        %1238 = vrot.lane.b32.xlu0 %v1162, 111
        %v1239 = vpop.permute.xlu0 %1238
        %1240 = vrot.lane.b32.xlu0 %v1163, 111
        %v1241 = vpop.permute.xlu0 %1240
        %v1242 = vsel %vm619, %v1239, %v1241
        %v1243 = vsel %vm619, %v1241, %v1239
        %v1244 = vmul.f32 %v1242, %v626
        %v1245 = vmul.f32 %v1243, %v630
        %1246 = vst [vmem:[#allocation2 + $0x80] sm:$0xff] %v1244
        %1247 = vst [vmem:[#allocation2 + $0x88] sm:$0xff] %v1245
        %v1248 = vld [vmem:[#allocation2] sm:$0xff]
        %v1249 = vld [vmem:[#allocation2 + $0x8] sm:$0xff]
        %v1250 = vld [vmem:[#allocation2 + $0x10] sm:$0xff]
        %v1251 = vld [vmem:[#allocation2 + $0x18] sm:$0xff]
        %v1252 = vld [vmem:[#allocation2 + $0x20] sm:$0xff]
        %v1253 = vld [vmem:[#allocation2 + $0x28] sm:$0xff]
        %v1254 = vld [vmem:[#allocation2 + $0x30] sm:$0xff]
        %v1255 = vld [vmem:[#allocation2 + $0x38] sm:$0xff]
        %v1256 = vld [vmem:[#allocation2 + $0x40] sm:$0xff]
        %v1257 = vld [vmem:[#allocation2 + $0x48] sm:$0xff]
        %v1258 = vld [vmem:[#allocation2 + $0x50] sm:$0xff]
        %v1259 = vld [vmem:[#allocation2 + $0x58] sm:$0xff]
        %v1260 = vld [vmem:[#allocation2 + $0x60] sm:$0xff]
        %v1261 = vld [vmem:[#allocation2 + $0x68] sm:$0xff]
        %v1262 = vld [vmem:[#allocation2 + $0x70] sm:$0xff]
        %v1263 = vld [vmem:[#allocation2 + $0x78] sm:$0xff]
        %v1264 = vld [vmem:[#allocation2 + $0x80] sm:$0xff]
        %v1265 = vld [vmem:[#allocation2 + $0x88] sm:$0xff]
        %v1267 = vsel %vm655, %v1046, 0
        %1269 = vmatprep.subr.mxu0 %v1249
        %1270 = vmatpush1.msra.mxu0 %v1248
        %1271 = vmatprep.subr.mxu0 %v1251
        %1272 = vmatpush1.msra.mxu0 %v1250
        %1273 = vmatprep.subr.mxu0 %v1253
        %1274 = vmatpush1.msra.mxu0 %v1252
        %1275 = vmatprep.subr.mxu0 %v1255
        %1276 = vmatpush1.msra.mxu0 %v1254
        %1277 = vmatprep.subr.mxu0 %v1257
        %1278 = vmatpush1.msra.mxu0 %v1256
        %1279 = vmatprep.subr.mxu0 %v1259
        %1280 = vmatpush1.msra.mxu0 %v1258
        %1281 = vmatprep.subr.mxu0 %v1261
        %1282 = vmatpush1.msra.mxu0 %v1260
        %1283 = vmatprep.subr.mxu0 %v1263
        %1284 = vmatpush1.msra.mxu0 %v1262
        %1285 = vmatprep.subr.mxu0 %v1265
        %1286 = vmatpush1.msra.mxu0 %v1264
        %1287 = vmatprep.subr.mxu0 0.0
        %1288 = vmatpush1.msra.mxu0 0.0
        %1289 = vmatprep.subr.mxu0 0.0
        %1290 = vmatpush1.msra.mxu0 0.0
        %1291 = vmatprep.subr.mxu0 0.0
        %1292 = vmatpush1.msra.mxu0 0.0
        %1293 = vmatprep.subr.mxu0 0.0
        %1294 = vmatpush1.msra.mxu0 0.0
        %1295 = vmatprep.subr.mxu0 0.0
        %1296 = vmatpush1.msra.mxu0 0.0
        %1297 = vmatprep.subr.mxu0 0.0
        %1298 = vmatpush1.msra.mxu0 0.0
        %1299 = vmatprep.subr.mxu0 0.0
        %1300 = vmatpush1.msra.mxu0 0.0
        %1301 = vmatprep.subr.mxu0 0.0
        %1302 = vmatpush1.msra.mxu0 0.0
        %1303 = vmatprep.subr.mxu0 0.0
        %1304 = vmatpush1.msra.mxu0 0.0
        %1305 = vmatprep.subr.mxu0 0.0
        %1306 = vmatpush1.msra.mxu0 0.0
        %1307 = vmatprep.subr.mxu0 0.0
        %1308 = vmatpush1.msra.mxu0 0.0
        %1309 = vmatprep.subr.mxu0 0.0
        %1310 = vmatpush1.msra.mxu0 0.0
        %1311 = vmatprep.subr.mxu0 0.0
        %1312 = vmatpush1.msra.mxu0 0.0
        %1313 = vmatprep.subr.mxu0 0.0
        %1314 = vmatpush1.msra.mxu0 0.0
        %1315 = vmatprep.subr.mxu0 0.0
        %1316 = vmatpush1.msra.mxu0 0.0
        %1317 = vmatprep.subr.mxu0 0.0
        %1318 = vmatpush1.msra.mxu0 0.0
        %1319 = vmatprep.subr.mxu0 0.0
        %1320 = vmatpush1.msra.mxu0 0.0
        %1321 = vmatprep.subr.mxu0 0.0
        %1322 = vmatpush1.msra.mxu0 0.0
        %1323 = vmatprep.subr.mxu0 0.0
        %1324 = vmatpush1.msra.mxu0 0.0
        %1325 = vmatprep.subr.mxu0 0.0
        %1326 = vmatpush1.msra.mxu0 0.0
        %1327 = vmatprep.subr.mxu0 0.0
        %1328 = vmatpush1.msra.mxu0 0.0
        %1329 = vmatprep.subr.mxu0 0.0
        %1330 = vmatpush1.msra.mxu0 0.0
        %1331 = vmatprep.subr.mxu0 0.0
        %1332 = vmatpush1.msra.mxu0 0.0
        %1333 = vmatprep.mubr.f32.mxu0 0.0
        %1334 = vmatmul.mubr.f32.gmra.mrb[0].mxu0 %v1267
        %v1335 = vpop.f32.mrb[0].mxu0
        %v1336 = vadd.f32 0.0, %v1335
        %v1337 = vpop.f32.mrb[0].mxu0
        %v1338 = vadd.f32 0.0, %v1337
        %1339 = vdwg.mxu0
        %v1342 = vrot.slane %v1336, 4
        %v1343 = vrot.slane %v1338, 4
        %1346 = vst [vmem:[%s290 + $0x10] sm:$0xf0] %v1342
        %1347 = vst [vmem:[%s290 + $0x18] sm:$0xf0] %v1343
        %s1348 = sand.u32 %s139, 1
        %s1349 = sand.u32 %s139, 1
        %s1350 = smul.addr %s1349, 32
        %s1351 = scalar_lea.vmem [#allocation5], %s1350
        // Predicated region
        $region87: #{dense_block_forward.1} parent=77 // pred_check
          %p1352 = pneg %p149
        $region88: #{dense_block_forward.1} parent=77 // pred_check_branch
          %1354 = sbr.rel (%p1352) target = $region90
        $region89: #{dense_block_forward.1} parent=77 // pred_region
          %s1355 = smul.u32 2, %s16
          %s1356 = smul.addr %s1355, 8
          %s1357 = scalar_lea.vmem %s5, %s1356
          // Predicated region
          $region91: #{dense_block_forward.1} parent=89 // pred_check
            _
          $region92: #{dense_block_forward.1} parent=89 // pred_check_branch
            %1359 = sbr.rel (0) target = $region94
          $region93: #{dense_block_forward.1} parent=89 // pred_region
            // Predicated region
            $region95: #{dense_block_forward.1} parent=93 // pred_check
              _
            $region96: #{dense_block_forward.1} parent=93 // pred_check_branch
              %1361 = sbr.rel (0) target = $region98
            $region97: #{dense_block_forward.1} parent=93 // pred_region
              loop: start=0, step=1, limit=1
              $region99: #{dense_block_forward.1} parent=97 // loop_pre_header
                _
              $region100: #{dense_block_forward.1} parent=97 // loop_header
                %s1363 = sphi 0, %s1367
                %p1364 = scmp.ge.s32.totalorder %s1363, 1
                %s1368 = sphi %s1351, %s1351
                %s1369 = sphi %s1357, %s1357
              $region101: #{dense_block_forward.1} parent=97 // loop_header_branch
                %1366 = sbr.rel (%p1364) target = $region105
              $region102: #{dense_block_forward.1} parent=97 // loop_body
                %v1370 = vld [vmem:[%s1368] sm:$0xff]
                %1371 = vst [vmem:[%s1369] sm:$0xff] %v1370
                %v1372 = vld [vmem:[%s1368 + $0x8] sm:$0xff]
                %1373 = vst [vmem:[%s1369 + $0x8] sm:$0xff] %v1372
                %v1374 = vld [vmem:[%s1368 + $0x10] sm:$0xff]
                %1375 = vst [vmem:[%s1369 + $0x20] sm:$0xff] %v1374
                %v1376 = vld [vmem:[%s1368 + $0x18] sm:$0xff]
                %1377 = vst [vmem:[%s1369 + $0x28] sm:$0xff] %v1376
              $region103: #{dense_block_forward.1} parent=97 // loop_footer
                %s1367 = sadd.s32 1, %s1363
              $region104: #{dense_block_forward.1} parent=97 // loop_footer_branch
                %1362 = sbr.rel target = $region100
              $region105: #{dense_block_forward.1} parent=97 // loop_exit
                _
            $region98: #{dense_block_forward.1} parent=93 // pred_fallthru
              _
            // Predicated region
            $region106: #{dense_block_forward.1} parent=93 // pred_check
              _
            $region107: #{dense_block_forward.1} parent=93 // pred_check_branch
              %1379 = sbr.rel target = $region109
            $region108: #{dense_block_forward.1} parent=93 // pred_region
              _
            $region109: #{dense_block_forward.1} parent=93 // pred_fallthru
              _
          $region94: #{dense_block_forward.1} parent=89 // pred_fallthru
            _
          %1380 = vnop
        $region90: #{dense_block_forward.1} parent=77 // pred_fallthru
          _
      $region78: #{dense_block_forward.1} parent=5 // pred_fallthru
        _
      %p1381 = scmp.le.s32.totalorder 2, %s11
      // Predicated region
      $region110: #{dense_block_forward.1} parent=5 // pred_check
        %p1382 = pneg %p1381
      $region111: #{dense_block_forward.1} parent=5 // pred_check_branch
        %1384 = sbr.rel (%p1382) target = $region113
      $region112: #{dense_block_forward.1} parent=5 // pred_region
        %s1385 = ssub.s32 %s11, 2
        // Predicated region
        $region114: #{dense_block_forward.1} parent=112 // pred_check
          %p1386 = pneg %p155
        $region115: #{dense_block_forward.1} parent=112 // pred_check_branch
          %1388 = sbr.rel (%p1386) target = $region117
        $region116: #{dense_block_forward.1} parent=112 // pred_region
          %s1389 = sand.u32 %s140, 1
          %s1390 = sand.u32 %s140, 1
          %s1391 = smul.addr %s1390, 32
          %s1392 = scalar_lea.vmem [#allocation5], %s1391
        $region117: #{dense_block_forward.1} parent=112 // pred_fallthru
          _
      $region113: #{dense_block_forward.1} parent=5 // pred_fallthru
        _
    $region6: #{dense_block_forward.1} parent=1 // loop_footer
      %s15 = sadd.s32 1, %s11
    $region7: #{dense_block_forward.1} parent=1 // loop_footer_branch
      %10 = sbr.rel target = $region3
    $region8: #{dense_block_forward.1} parent=1 // loop_exit
      _

</llo_original>
